<compile_context>
chip_gen: v7x
topology: tpu7x:2x2x1
jax: 0.10.0
libtpu: 0.0.40
codegen_flags: <defaults>
</compile_context>

<pallas_src>
import functools

import jax
import jax.numpy as jnp
from jax import lax
from jax.experimental import pallas as pl
from jax.experimental.pallas import tpu as pltpu


# --------------------------------------------------------------------------
# Stage 1: batched GraphConv stack  ->  centered per-step features A (bf16)
# --------------------------------------------------------------------------
def _gcn_features_kernel(x_ref, adj_ref, w1_ref, w2_ref, a_ref, *, inv_n):
    """x: (N,F_in) bf16, adj: (N,N) bf16, w1: (F_in,S*H1) bf16,
    w2: (S*H1,S*H2) bf16 block-diagonal, a: (N,S*H2) bf16 out."""
    adj = adj_ref[...]

    # GraphConv #1 for all steps at once: relu(adj @ (X @ W1_cat))
    xw = jnp.dot(x_ref[...], w1_ref[...],
                 preferred_element_type=jnp.float32).astype(jnp.bfloat16)
    h = jnp.maximum(jnp.dot(adj, xw, preferred_element_type=jnp.float32),
                    0.0).astype(jnp.bfloat16)                     # (N, S*H1)

    # GraphConv #2 for all steps at once via block-diagonal W2.
    t = jnp.dot(h, w2_ref[...],
                preferred_element_type=jnp.float32).astype(jnp.bfloat16)
    a = jnp.maximum(jnp.dot(adj, t, preferred_element_type=jnp.float32), 0.0)

    # Column-wise centering over the N real nodes (matches a - a.mean(dim=0)).
    a = a - jnp.sum(a, axis=0, keepdims=True) * inv_n
    a_ref[...] = a.astype(jnp.bfloat16)


# --------------------------------------------------------------------------
# Stage 2: per-step Gram + sigmoid + coefficient accumulation (row-tiled grid)
# --------------------------------------------------------------------------
def _gram_accum_kernel(scal_ref, a_rows_ref, a_full_ref, out_ref,
                       *, num_steps, h2):
    """scal: SMEM f32[S+1] = [half_coef_0..half_coef_{S-1}, sum(half_coefs)]
    a_rows: (TM, S*H2) bf16 row tile, a_full: (Np, S*H2) bf16,
    out: (TM, Np) f32 row tile."""
    acc = None
    for s in range(num_steps):
        # 0.5x is exact in bf16 -> logits come out already halved for tanh.
        lr = a_rows_ref[:, s * h2:(s + 1) * h2] * 0.5
        lc = a_full_ref[:, s * h2:(s + 1) * h2]
        logits = lax.dot_general(lr, lc, (((1,), (1,)), ((), ())),
                                 preferred_element_type=jnp.float32)
        term = scal_ref[s] * jnp.tanh(logits)       # single EUP op per step
        acc = term if acc is None else acc + term
    # coef*sigmoid = half_coef*tanh + half_coef  ->  add folded bias once.
    out_ref[...] = acc + scal_ref[num_steps]


# --------------------------------------------------------------------------
# Wrapper
# --------------------------------------------------------------------------
def _vmem_budget(nbytes, floor=32 << 20, cap=56 << 20):
    return int(min(max(nbytes, floor), cap))


def graph_diffusion_forward(X, adj, w1_stack, w2_stack,
                            sqrt_one_minus_alphas_cumprod,
                            cumulative_sqrt_one_minus_alphas_cumprod,
                            time_step, timesteps):
    """Pallas implementation of GraphDiffusion.forward.
    time_step / timesteps are static Python ints (they drive a Python range
    in the reference module)."""
    N, F_in = X.shape
    H1 = w1_stack.shape[-1]
    H2 = w2_stack.shape[-1]
    num_steps = timesteps + 1 - time_step
    assert num_steps >= 1 and time_step >= 1
    SH1, SH2 = num_steps * H1, num_steps * H2
    cdt = jnp.bfloat16

    # get_value_at_index(arr, t) == arr[t-1]; pre-divide by the cumulative
    # coefficient; fold the sigmoid->tanh constants into the scalars.
    denom = cumulative_sqrt_one_minus_alphas_cumprod[time_step - 1].astype(jnp.float32)
    coefs = (sqrt_one_minus_alphas_cumprod[time_step - 1: timesteps]
             .astype(jnp.float32) / denom)
    half_coefs = 0.5 * coefs
    scalars = jnp.concatenate([half_coefs, jnp.sum(half_coefs)[None]])  # (S+1,)

    # bf16 operands for the MXU (adj is NOT padded / copied through HBM).
    Xb = X.astype(cdt)
    adjb = adj.astype(cdt)
    w1s = w1_stack[time_step: timesteps + 1].astype(cdt)   # (S, F_in, H1)
    w2s = w2_stack[time_step: timesteps + 1].astype(cdt)   # (S, H1, H2)
    w1_cat = jnp.transpose(w1s, (1, 0, 2)).reshape(F_in, SH1)   # (F_in, S*H1)
    w2_bd = jnp.zeros((SH1, SH2), cdt)
    for s in range(num_steps):
        w2_bd = w2_bd.at[s * H1:(s + 1) * H1, s * H2:(s + 1) * H2].set(w2s[s])

    # ---- Stage 1: centered per-step features, one wide pass per adj matmul.
    limit1 = _vmem_budget(2 * N * N + 2 * N * F_in + 2 * F_in * SH1
                          + 2 * SH1 * SH2 + 10 * N * (SH1 + SH2) + (4 << 20))
    a_c = pl.pallas_call(
        functools.partial(_gcn_features_kernel, inv_n=1.0 / N),
        out_shape=jax.ShapeDtypeStruct((N, SH2), cdt),
        in_specs=[pl.BlockSpec(memory_space=pltpu.MemorySpace.VMEM)] * 4,
        out_specs=pl.BlockSpec(memory_space=pltpu.MemorySpace.VMEM),
        compiler_params=pltpu.CompilerParams(vmem_limit_bytes=limit1),
    )(Xb, adjb, w1_cat, w2_bd)

    # Pad only the (small) feature matrix so the (N,N) output is lane-dense.
    Np = ((N + 127) // 128) * 128
    a_p = a_c if Np == N else jnp.zeros((Np, SH2), cdt).at[:N].set(a_c)

    # ---- Stage 2: row-tiled Gram / sigmoid / accumulate.
    TM = 256 if Np % 256 == 0 else 128
    grid = (Np // TM,)
    limit2 = _vmem_budget(4 * TM * SH2 + 4 * Np * SH2 + 8 * TM * Np
                          + 4 * (num_steps + 1) * TM * Np + (4 << 20))
    out_p = pl.pallas_call(
        functools.partial(_gram_accum_kernel, num_steps=num_steps, h2=H2),
        out_shape=jax.ShapeDtypeStruct((Np, Np), jnp.float32),
        grid_spec=pltpu.PrefetchScalarGridSpec(
            num_scalar_prefetch=1,
            grid=grid,
            in_specs=[pl.BlockSpec((TM, SH2), lambda i, scal: (i, 0)),
                      pl.BlockSpec((Np, SH2), lambda i, scal: (0, 0))],
            out_specs=pl.BlockSpec((TM, Np), lambda i, scal: (i, 0)),
        ),
        compiler_params=pltpu.CompilerParams(
            dimension_semantics=("parallel",),
            vmem_limit_bytes=limit2),
    )(scalars, a_p, a_p)

    return out_p[:N, :N]


# --------------------------------------------------------------------------
# Pure-JAX reference (per-step, same bf16-operand / f32-accumulate precision)
# --------------------------------------------------------------------------
def graph_diffusion_reference(X, adj, w1_stack, w2_stack,
                              sqrt_one_minus_alphas_cumprod,
                              cumulative_sqrt_one_minus_alphas_cumprod,
                              time_step, timesteps):
    N = X.shape[0]
    denom = cumulative_sqrt_one_minus_alphas_cumprod[time_step - 1].astype(jnp.float32)
    xb = X.astype(jnp.bfloat16)
    ab = adj.astype(jnp.bfloat16)
    pred = jnp.zeros((N, N), jnp.float32)
    for t in range(time_step, timesteps + 1):
        coef = sqrt_one_minus_alphas_cumprod[t - 1].astype(jnp.float32)
        w1 = w1_stack[t].astype(jnp.bfloat16)
        w2 = w2_stack[t].astype(jnp.bfloat16)
        h = jnp.dot(xb, w1, preferred_element_type=jnp.float32).astype(jnp.bfloat16)
        h = jnp.maximum(jnp.dot(ab, h, preferred_element_type=jnp.float32), 0.0)
        a = jnp.dot(h.astype(jnp.bfloat16), w2,
                    preferred_element_type=jnp.float32).astype(jnp.bfloat16)
        a = jnp.maximum(jnp.dot(ab, a, preferred_element_type=jnp.float32), 0.0)
        a = (a - jnp.mean(a, axis=0, keepdims=True)).astype(jnp.bfloat16)
        logits = lax.dot_general(a, a, (((1,), (1,)), ((), ())),
                                 preferred_element_type=jnp.float32)
        pred = pred + coef * jax.nn.sigmoid(logits)
    return pred / denom


if __name__ == "__main__":
    key = jax.random.PRNGKey(0)
    k_x, k_adj, k_w1, k_w2 = jax.random.split(key, 4)

    # Small shapes consistent with the module (args.input_dim etc.)
    N = 64            # number of graph nodes
    F_in = 32         # args.input_dim
    H1 = 64           # args.hidden1_dim
    H2 = 32           # args.hidden2_dim
    diffusion_n = 4   # args.n  -> timesteps
    time_step = 1
    timesteps = diffusion_n
    n_layers = diffusion_n + 1

    X = jax.random.normal(k_x, (N, F_in), jnp.float32)
    adj_raw = (jax.random.uniform(k_adj, (N, N)) < 0.2).astype(jnp.float32)
    adj = jnp.maximum(adj_raw, adj_raw.T)   # symmetric adjacency

    def glorot(k, shape):
        fan_in, fan_out = shape[-2], shape[-1]
        lim = (6.0 / (fan_in + fan_out)) ** 0.5
        return jax.random.uniform(k, shape, jnp.float32, -lim, lim)

    w1_stack = glorot(k_w1, (n_layers, F_in, H1))
    w2_stack = glorot(k_w2, (n_layers, H1, H2))

    # Deterministic diffusion schedules (stand-ins for the globals in train.py).
    betas = jnp.linspace(1e-4, 0.02, timesteps + 1)
    alphas_cumprod = jnp.cumprod(1.0 - betas)
    sqrt_one_minus_alphas_cumprod = jnp.sqrt(1.0 - alphas_cumprod)
    cumulative_sqrt_one_minus_alphas_cumprod = jnp.cumsum(sqrt_one_minus_alphas_cumprod)

    fwd = jax.jit(functools.partial(graph_diffusion_forward,
                                    time_step=time_step, timesteps=timesteps))
    out = fwd(X, adj, w1_stack, w2_stack,
              sqrt_one_minus_alphas_cumprod,
              cumulative_sqrt_one_minus_alphas_cumprod)
    out = jax.block_until_ready(out)

    ref = graph_diffusion_reference(X, adj, w1_stack, w2_stack,
                                    sqrt_one_minus_alphas_cumprod,
                                    cumulative_sqrt_one_minus_alphas_cumprod,
                                    time_step, timesteps)
    assert out.shape == (N, N)
    assert jnp.allclose(out, ref, atol=5e-3, rtol=5e-3), "mismatch vs reference"
    print("KERNEL_OK")
</pallas_src>

<mosaic_0001>
module attributes {stable_mosaic.version = 11 : i64} {
  func.func @_gcn_features_kernel(%arg0: memref<64x32xbf16, #tpu.memory_space<vmem>>, %arg1: memref<64x64xbf16, #tpu.memory_space<vmem>>, %arg2: memref<32x256xbf16, #tpu.memory_space<vmem>>, %arg3: memref<256x128xbf16, #tpu.memory_space<vmem>>, %arg4: memref<64x128xbf16, #tpu.memory_space<vmem>>) attributes {dimension_semantics = [], scalar_prefetch = 0 : i64, scratch_operands = 0 : i64, tpu.core_type = #tpu.core_type<tc>} {
    %c0 = arith.constant 0 : index
    %c0_0 = arith.constant 0 : index
    %0 = vector.load %arg1[%c0, %c0_0] : memref<64x64xbf16, #tpu.memory_space<vmem>>, vector<64x64xbf16>
    %c0_1 = arith.constant 0 : index
    %c0_2 = arith.constant 0 : index
    %1 = vector.load %arg0[%c0_1, %c0_2] : memref<64x32xbf16, #tpu.memory_space<vmem>>, vector<64x32xbf16>
    %c0_3 = arith.constant 0 : index
    %c0_4 = arith.constant 0 : index
    %2 = vector.load %arg2[%c0_3, %c0_4] : memref<32x256xbf16, #tpu.memory_space<vmem>>, vector<32x256xbf16>
    %cst = arith.constant dense<0.000000e+00> : vector<64x256xf32>
    %3 = tpu.matmul %1, %2, %cst {dimension_numbers = #tpu.dot_dimension_numbers<[1], [0], [0], [1], [0, 0, 1, 1], [], []>} : vector<64x32xbf16>, vector<32x256xbf16>, vector<64x256xf32> -> vector<64x256xf32>
    %4 = arith.truncf %3 : vector<64x256xf32> to vector<64x256xbf16>
    %cst_5 = arith.constant dense<0.000000e+00> : vector<64x256xf32>
    %5 = tpu.matmul %0, %4, %cst_5 {dimension_numbers = #tpu.dot_dimension_numbers<[1], [0], [0], [1], [0, 0, 1, 1], [], []>} : vector<64x64xbf16>, vector<64x256xbf16>, vector<64x256xf32> -> vector<64x256xf32>
    %cst_6 = arith.constant 0.000000e+00 : f32
    %6 = vector.broadcast %cst_6 : f32 to vector<64x256xf32>
    %7 = arith.maximumf %5, %6 : vector<64x256xf32>
    %8 = arith.truncf %7 : vector<64x256xf32> to vector<64x256xbf16>
    %c0_7 = arith.constant 0 : index
    %c0_8 = arith.constant 0 : index
    %9 = vector.load %arg3[%c0_7, %c0_8] : memref<256x128xbf16, #tpu.memory_space<vmem>>, vector<256x128xbf16>
    %cst_9 = arith.constant dense<0.000000e+00> : vector<64x128xf32>
    %10 = tpu.matmul %8, %9, %cst_9 {dimension_numbers = #tpu.dot_dimension_numbers<[1], [0], [0], [1], [0, 0, 1, 1], [], []>} : vector<64x256xbf16>, vector<256x128xbf16>, vector<64x128xf32> -> vector<64x128xf32>
    %11 = arith.truncf %10 : vector<64x128xf32> to vector<64x128xbf16>
    %cst_10 = arith.constant dense<0.000000e+00> : vector<64x128xf32>
    %12 = tpu.matmul %0, %11, %cst_10 {dimension_numbers = #tpu.dot_dimension_numbers<[1], [0], [0], [1], [0, 0, 1, 1], [], []>} : vector<64x64xbf16>, vector<64x128xbf16>, vector<64x128xf32> -> vector<64x128xf32>
    %cst_11 = arith.constant 0.000000e+00 : f32
    %13 = vector.broadcast %cst_11 : f32 to vector<64x128xf32>
    %14 = arith.maximumf %12, %13 : vector<64x128xf32>
    %cst_12 = arith.constant dense<0.000000e+00> : vector<128xf32>
    %15 = vector.multi_reduction <add>, %14, %cst_12 [0] : vector<64x128xf32> to vector<128xf32>
    %16 = vector.shape_cast %15 : vector<128xf32> to vector<1x128xf32>
    %cst_13 = arith.constant 1.562500e-02 : f32
    %17 = vector.broadcast %cst_13 : f32 to vector<1x128xf32>
    %18 = arith.mulf %16, %17 : vector<1x128xf32>
    %19 = vector.broadcast %18 : vector<1x128xf32> to vector<64x128xf32>
    %20 = arith.subf %14, %19 : vector<64x128xf32>
    %21 = arith.truncf %20 : vector<64x128xf32> to vector<64x128xbf16>
    %c0_14 = arith.constant 0 : index
    %c0_15 = arith.constant 0 : index
    %22 = vector.load %arg4[%c0_14, %c0_15] : memref<64x128xbf16, #tpu.memory_space<vmem>>, vector<64x128xbf16>
    tpu.vector_store %arg4[%c0_14, %c0_15], %21 {strides = array<i32>} : memref<64x128xbf16, #tpu.memory_space<vmem>>, vector<64x128xbf16>,
    return
  }
}

module attributes {stable_mosaic.version = 11 : i64} {
  func.func @_gram_accum_kernel(%arg0: i32, %arg1: memref<5xf32, #tpu.memory_space<smem>>, %arg2: memref<128x128xbf16, #tpu.memory_space<vmem>>, %arg3: memref<128x128xbf16, #tpu.memory_space<vmem>>, %arg4: memref<128x128xf32, #tpu.memory_space<vmem>>) attributes {dimension_semantics = [#tpu.dimension_semantics<parallel>], iteration_bounds = array<i64: 1>, scalar_prefetch = 1 : i64, scratch_operands = 0 : i64, tpu.core_type = #tpu.core_type<tc>, window_params = [{transform_indices = @transform_0, window_bounds = array<i64: 128, 128>}, {pipeline_mode = #tpu.pipeline_mode<synchronous>, transform_indices = @transform_1, window_bounds = array<i64: 128, 128>}, {transform_indices = @transform_2, window_bounds = array<i64: 128, 128>}]} {
    %c0 = arith.constant 0 : index
    %c0_0 = arith.constant 0 : index
    %0 = vector.load %arg2[%c0, %c0_0] : memref<128x128xbf16, #tpu.memory_space<vmem>>, vector<128x32xbf16>
    %cst = arith.constant 5.000000e-01 : bf16
    %1 = vector.broadcast %cst : bf16 to vector<128x32xbf16>
    %2 = arith.mulf %0, %1 : vector<128x32xbf16>
    %c0_1 = arith.constant 0 : index
    %c0_2 = arith.constant 0 : index
    %3 = vector.load %arg3[%c0_1, %c0_2] : memref<128x128xbf16, #tpu.memory_space<vmem>>, vector<128x32xbf16>
    %cst_3 = arith.constant dense<0.000000e+00> : vector<128x128xf32>
    %4 = tpu.matmul %2, %3, %cst_3 {dimension_numbers = #tpu.dot_dimension_numbers<[1], [1], [0], [0], [0, 0, 1, 0], [], []>} : vector<128x32xbf16>, vector<128x32xbf16>, vector<128x128xf32> -> vector<128x128xf32>
    %c0_4 = arith.constant 0 : index
    %5 = memref.load %arg1[%c0_4] : memref<5xf32, #tpu.memory_space<smem>>
    %6 = math.tanh %4 : vector<128x128xf32>
    %7 = vector.broadcast %5 : f32 to vector<128x128xf32>
    %8 = arith.mulf %7, %6 : vector<128x128xf32>
    %c0_5 = arith.constant 0 : index
    %c32 = arith.constant 32 : index
    %9 = vector.load %arg2[%c0_5, %c32] : memref<128x128xbf16, #tpu.memory_space<vmem>>, vector<128x32xbf16>
    %cst_6 = arith.constant 5.000000e-01 : bf16
    %10 = vector.broadcast %cst_6 : bf16 to vector<128x32xbf16>
    %11 = arith.mulf %9, %10 : vector<128x32xbf16>
    %c0_7 = arith.constant 0 : index
    %c32_8 = arith.constant 32 : index
    %12 = vector.load %arg3[%c0_7, %c32_8] : memref<128x128xbf16, #tpu.memory_space<vmem>>, vector<128x32xbf16>
    %cst_9 = arith.constant dense<0.000000e+00> : vector<128x128xf32>
    %13 = tpu.matmul %11, %12, %cst_9 {dimension_numbers = #tpu.dot_dimension_numbers<[1], [1], [0], [0], [0, 0, 1, 0], [], []>} : vector<128x32xbf16>, vector<128x32xbf16>, vector<128x128xf32> -> vector<128x128xf32>
    %c1 = arith.constant 1 : index
    %14 = memref.load %arg1[%c1] : memref<5xf32, #tpu.memory_space<smem>>
    %15 = math.tanh %13 : vector<128x128xf32>
    %16 = vector.broadcast %14 : f32 to vector<128x128xf32>
    %17 = arith.mulf %16, %15 : vector<128x128xf32>
    %18 = arith.addf %8, %17 : vector<128x128xf32>
    %c0_10 = arith.constant 0 : index
    %c64 = arith.constant 64 : index
    %19 = vector.load %arg2[%c0_10, %c64] : memref<128x128xbf16, #tpu.memory_space<vmem>>, vector<128x32xbf16>
    %cst_11 = arith.constant 5.000000e-01 : bf16
    %20 = vector.broadcast %cst_11 : bf16 to vector<128x32xbf16>
    %21 = arith.mulf %19, %20 : vector<128x32xbf16>
    %c0_12 = arith.constant 0 : index
    %c64_13 = arith.constant 64 : index
    %22 = vector.load %arg3[%c0_12, %c64_13] : memref<128x128xbf16, #tpu.memory_space<vmem>>, vector<128x32xbf16>
    %cst_14 = arith.constant dense<0.000000e+00> : vector<128x128xf32>
    %23 = tpu.matmul %21, %22, %cst_14 {dimension_numbers = #tpu.dot_dimension_numbers<[1], [1], [0], [0], [0, 0, 1, 0], [], []>} : vector<128x32xbf16>, vector<128x32xbf16>, vector<128x128xf32> -> vector<128x128xf32>
    %c2 = arith.constant 2 : index
    %24 = memref.load %arg1[%c2] : memref<5xf32, #tpu.memory_space<smem>>
    %25 = math.tanh %23 : vector<128x128xf32>
    %26 = vector.broadcast %24 : f32 to vector<128x128xf32>
    %27 = arith.mulf %26, %25 : vector<128x128xf32>
    %28 = arith.addf %18, %27 : vector<128x128xf32>
    %c0_15 = arith.constant 0 : index
    %c96 = arith.constant 96 : index
    %29 = vector.load %arg2[%c0_15, %c96] : memref<128x128xbf16, #tpu.memory_space<vmem>>, vector<128x32xbf16>
    %cst_16 = arith.constant 5.000000e-01 : bf16
    %30 = vector.broadcast %cst_16 : bf16 to vector<128x32xbf16>
    %31 = arith.mulf %29, %30 : vector<128x32xbf16>
    %c0_17 = arith.constant 0 : index
    %c96_18 = arith.constant 96 : index
    %32 = vector.load %arg3[%c0_17, %c96_18] : memref<128x128xbf16, #tpu.memory_space<vmem>>, vector<128x32xbf16>
    %cst_19 = arith.constant dense<0.000000e+00> : vector<128x128xf32>
    %33 = tpu.matmul %31, %32, %cst_19 {dimension_numbers = #tpu.dot_dimension_numbers<[1], [1], [0], [0], [0, 0, 1, 0], [], []>} : vector<128x32xbf16>, vector<128x32xbf16>, vector<128x128xf32> -> vector<128x128xf32>
    %c3 = arith.constant 3 : index
    %34 = memref.load %arg1[%c3] : memref<5xf32, #tpu.memory_space<smem>>
    %35 = math.tanh %33 : vector<128x128xf32>
    %36 = vector.broadcast %34 : f32 to vector<128x128xf32>
    %37 = arith.mulf %36, %35 : vector<128x128xf32>
    %38 = arith.addf %28, %37 : vector<128x128xf32>
    %c4 = arith.constant 4 : index
    %39 = memref.load %arg1[%c4] : memref<5xf32, #tpu.memory_space<smem>>
    %40 = vector.broadcast %39 : f32 to vector<128x128xf32>
    %41 = arith.addf %38, %40 : vector<128x128xf32>
    %c0_20 = arith.constant 0 : index
    %c0_21 = arith.constant 0 : index
    %42 = vector.load %arg4[%c0_20, %c0_21] : memref<128x128xf32, #tpu.memory_space<vmem>>, vector<128x128xf32>
    tpu.vector_store %arg4[%c0_20, %c0_21], %41 {strides = array<i32>} : memref<128x128xf32, #tpu.memory_space<vmem>>, vector<128x128xf32>,
    return
  }
  func.func @transform_0(%arg0: i32, %arg1: memref<5xf32, #tpu.memory_space<smem>>) -> (i32, i32) {
    %c0_i32 = arith.constant 0 : i32
    %c0_i32_0 = arith.constant 0 : i32
    return %arg0, %c0_i32 : i32, i32
  }
  func.func @transform_1(%arg0: i32, %arg1: memref<5xf32, #tpu.memory_space<smem>>) -> (i32, i32) {
    %c0_i32 = arith.constant 0 : i32
    %c0_i32_0 = arith.constant 0 : i32
    %c0_i32_1 = arith.constant 0 : i32
    return %c0_i32, %c0_i32_0 : i32, i32
  }
  func.func @transform_2(%arg0: i32, %arg1: memref<5xf32, #tpu.memory_space<smem>>) -> (i32, i32) {
    %c0_i32 = arith.constant 0 : i32
    %c0_i32_0 = arith.constant 0 : i32
    return %arg0, %c0_i32 : i32, i32
  }
}

</mosaic_0001>

<llo_original>
// kernel: graph_diffusion_forward.2
$region0: #{graph_diffusion_forward.2}
  #allocation0 [shape = 'u32[]', space=smem, size = 0x4, offset = 0x4, fixed_abs, tag = 'smem constant byte address 0x4 - core index']
  #allocation1 [shape = 'u32[144,128]{1,0:T(1,128)}', space=vmem, size = 0x12000, scoped, tag = 'internal scratch']
  %s0 = inlined_call_operand.vmem [shape: bf16[64,32], index: 0, kind: input, shape index: {}]
  %s1 = inlined_call_operand.vmem [shape: bf16[64,64], index: 1, kind: input, shape index: {}]
  %s2 = inlined_call_operand.vmem [shape: bf16[32,256], index: 2, kind: input, shape index: {}]
  %s3 = inlined_call_operand.vmem [shape: bf16[256,128], index: 3, kind: input, shape index: {}]
  %s4 = inlined_call_operand.vmem [shape: bf16[64,128], index: 4, kind: output, shape index: {}]
  %s5 = sld [smem:[#allocation0]]
  $region26: #{graph_diffusion_forward.2} parent=0
    _
  %s7 = ssub.s32 1, %s5
  %s8 = scalar_select 0, %s7, %s5
  // Predicated region
  $region2: #{graph_diffusion_forward.2} parent=0 // pred_check
    _
  $region3: #{graph_diffusion_forward.2} parent=0 // pred_check_branch
    %10 = sbr.rel (0) target = $region5
  $region4: #{graph_diffusion_forward.2} parent=0 // pred_region
    _
  $region5: #{graph_diffusion_forward.2} parent=0 // pred_fallthru
    _
  // Predicated region
  $region6: #{graph_diffusion_forward.2} parent=0 // pred_check
    _
  $region7: #{graph_diffusion_forward.2} parent=0 // pred_check_branch
    %12 = sbr.rel (0) target = $region9
  $region8: #{graph_diffusion_forward.2} parent=0 // pred_region
    _
  $region9: #{graph_diffusion_forward.2} parent=0 // pred_fallthru
    _
  // Predicated region
  $region10: #{graph_diffusion_forward.2} parent=0 // pred_check
    _
  $region11: #{graph_diffusion_forward.2} parent=0 // pred_check_branch
    %14 = sbr.rel (0) target = $region13
  $region12: #{graph_diffusion_forward.2} parent=0 // pred_region
    _
  $region13: #{graph_diffusion_forward.2} parent=0 // pred_fallthru
    _
  // Predicated region
  $region14: #{graph_diffusion_forward.2} parent=0 // pred_check
    _
  $region15: #{graph_diffusion_forward.2} parent=0 // pred_check_branch
    %16 = sbr.rel (0) target = $region17
  $region16: #{graph_diffusion_forward.2} parent=0 // pred_region
    _
  $region17: #{graph_diffusion_forward.2} parent=0 // pred_fallthru
    _
  %v18 = vld [vmem:[%s1] sm:$0xf]
  %v19 = vld [vmem:[%s1 + $0x4] sm:$0xf]
  %v20 = vld [vmem:[%s1 + $0x8] sm:$0xf]
  %v21 = vld [vmem:[%s1 + $0xc] sm:$0xf]
  %v22 = vld [vmem:[%s1 + $0x10] sm:$0xf]
  %v23 = vld [vmem:[%s1 + $0x14] sm:$0xf]
  %v24 = vld [vmem:[%s1 + $0x18] sm:$0xf]
  %v25 = vld [vmem:[%s1 + $0x1c] sm:$0xf]
  %v26 = vld [vmem:[%s0] sm:$0xf]
  %v27 = vld [vmem:[%s0 + $0x4] sm:$0xf]
  %v28 = vld [vmem:[%s0 + $0x8] sm:$0xf]
  %v29 = vld [vmem:[%s0 + $0xc] sm:$0xf]
  %v30 = vld [vmem:[%s0 + $0x10] sm:$0xf]
  %v31 = vld [vmem:[%s0 + $0x14] sm:$0xf]
  %v32 = vld [vmem:[%s0 + $0x18] sm:$0xf]
  %v33 = vld [vmem:[%s0 + $0x1c] sm:$0xf]
  %v34 = vld [vmem:[%s2] sm:$0xff]
  %v35 = vld [vmem:[%s2 + $0x8] sm:$0xff]
  %v36 = vld [vmem:[%s2 + $0x10] sm:$0xff]
  %v37 = vld [vmem:[%s2 + $0x18] sm:$0xff]
  %v46 = vunpack.c.l.b16 %v26
  %v47 = vunpack.c.l.b16 %v27
  %v48 = vunpack.c.l.b16 %v28
  %v49 = vunpack.c.l.b16 %v29
  %v50 = vunpack.c.l.b16 %v30
  %v51 = vunpack.c.l.b16 %v31
  %v52 = vunpack.c.l.b16 %v32
  %v53 = vunpack.c.l.b16 %v33
  %v54 = vpack.c.b16 %v47, %v46
  %v55 = vpack.c.b16 %v49, %v48
  %v56 = vpack.c.b16 %v51, %v50
  %v57 = vpack.c.b16 %v53, %v52
  %v62 = vunpack.c.l.b16 %v34
  %v63 = vunpack.c.h.b16 %v34
  %v64 = vunpack.c.l.b16 %v35
  %v65 = vunpack.c.h.b16 %v35
  %v66 = vunpack.c.l.b16 %v36
  %v67 = vunpack.c.h.b16 %v36
  %v68 = vunpack.c.l.b16 %v37
  %v69 = vunpack.c.h.b16 %v37
  %v70 = vpack.c.b16 %v64, %v62
  %v71 = vpack.c.b16 %v65, %v63
  %v72 = vpack.c.b16 %v68, %v66
  %v73 = vpack.c.b16 %v69, %v67
  %vm78 = vcmask 261120
  %v80 = vsel %vm78, %v54, 0
  %v83 = vsel %vm78, %v55, 0
  %v86 = vsel %vm78, %v56, 0
  %v89 = vsel %vm78, %v57, 0
  %91 = vmatprep.subr.bf16.mxu0 %v71
  %92 = vmatpush1.bf16.msra.mxu0 %v70
  %93 = vmatprep.subr.bf16.mxu0 %v73
  %94 = vmatpush1.bf16.msra.mxu0 %v72
  %95 = vmatprep.subr.bf16.mxu0 0
  %96 = vmatpush1.bf16.msra.mxu0 0
  %97 = vmatprep.subr.bf16.mxu0 0
  %98 = vmatpush1.bf16.msra.mxu0 0
  %99 = vmatprep.subr.bf16.mxu0 0
  %100 = vmatpush1.bf16.msra.mxu0 0
  %101 = vmatprep.subr.bf16.mxu0 0
  %102 = vmatpush1.bf16.msra.mxu0 0
  %103 = vmatprep.subr.bf16.mxu0 0
  %104 = vmatpush1.bf16.msra.mxu0 0
  %105 = vmatprep.subr.bf16.mxu0 0
  %106 = vmatpush1.bf16.msra.mxu0 0
  %107 = vmatprep.subr.bf16.mxu0 0
  %108 = vmatpush1.bf16.msra.mxu0 0
  %109 = vmatprep.subr.bf16.mxu0 0
  %110 = vmatpush1.bf16.msra.mxu0 0
  %111 = vmatprep.subr.bf16.mxu0 0
  %112 = vmatpush1.bf16.msra.mxu0 0
  %113 = vmatprep.subr.bf16.mxu0 0
  %114 = vmatpush1.bf16.msra.mxu0 0
  %115 = vmatprep.subr.bf16.mxu0 0
  %116 = vmatpush1.bf16.msra.mxu0 0
  %117 = vmatprep.subr.bf16.mxu0 0
  %118 = vmatpush1.bf16.msra.mxu0 0
  %119 = vmatprep.subr.bf16.mxu0 0
  %120 = vmatpush1.bf16.msra.mxu0 0
  %121 = vmatprep.subr.bf16.mxu0 0
  %122 = vmatpush1.bf16.msra.mxu0 0
  %123 = vmatprep.mubr.bf16.mxu0 0
  %124 = vmatmul.mubr.bf16.gmra.mrb[0].mxu0 %v80
  %v125 = vpop.f32.mrb[0].mxu0
  %v126 = vadd.f32 0.0, %v125
  %v127 = vpop.f32.mrb[0].mxu0
  %v128 = vadd.f32 0.0, %v127
  %v129 = vpop.f32.mrb[0].mxu0
  %v130 = vadd.f32 0.0, %v129
  %v131 = vpop.f32.mrb[0].mxu0
  %v132 = vadd.f32 0.0, %v131
  %133 = vmatprep.mubr.bf16.mxu0 0
  %134 = vmatmul.mubr.bf16.gmra.mrb[0].mxu0 %v83
  %v135 = vpop.f32.mrb[0].mxu0
  %v136 = vadd.f32 0.0, %v135
  %v137 = vpop.f32.mrb[0].mxu0
  %v138 = vadd.f32 0.0, %v137
  %v139 = vpop.f32.mrb[0].mxu0
  %v140 = vadd.f32 0.0, %v139
  %v141 = vpop.f32.mrb[0].mxu0
  %v142 = vadd.f32 0.0, %v141
  %143 = vmatprep.mubr.bf16.mxu0 0
  %144 = vmatmul.mubr.bf16.gmra.mrb[0].mxu0 %v86
  %v145 = vpop.f32.mrb[0].mxu0
  %v146 = vadd.f32 0.0, %v145
  %v147 = vpop.f32.mrb[0].mxu0
  %v148 = vadd.f32 0.0, %v147
  %v149 = vpop.f32.mrb[0].mxu0
  %v150 = vadd.f32 0.0, %v149
  %v151 = vpop.f32.mrb[0].mxu0
  %v152 = vadd.f32 0.0, %v151
  %153 = vmatprep.mubr.bf16.mxu0 0
  %154 = vmatmul.mubr.bf16.gmra.mrb[0].mxu0 %v89
  %v155 = vpop.f32.mrb[0].mxu0
  %v156 = vadd.f32 0.0, %v155
  %v157 = vpop.f32.mrb[0].mxu0
  %v158 = vadd.f32 0.0, %v157
  %v159 = vpop.f32.mrb[0].mxu0
  %v160 = vadd.f32 0.0, %v159
  %v161 = vpop.f32.mrb[0].mxu0
  %v162 = vadd.f32 0.0, %v161
  %163 = vdwg.mxu0
  %v164 = vpack.c.bf16 %v130, %v126
  %v165 = vpack.c.bf16 %v132, %v128
  %v166 = vpack.c.bf16 %v140, %v136
  %v167 = vpack.c.bf16 %v142, %v138
  %v168 = vpack.c.bf16 %v150, %v146
  %v169 = vpack.c.bf16 %v152, %v148
  %v170 = vpack.c.bf16 %v160, %v156
  %v171 = vpack.c.bf16 %v162, %v158
  %v180 = vunpack.c.l.b16 %v18
  %v181 = vunpack.c.l.b16 %v19
  %v182 = vunpack.c.l.b16 %v20
  %v183 = vunpack.c.l.b16 %v21
  %v184 = vunpack.c.l.b16 %v22
  %v185 = vunpack.c.l.b16 %v23
  %v186 = vunpack.c.l.b16 %v24
  %v187 = vunpack.c.l.b16 %v25
  %v188 = vpack.c.b16 %v181, %v180
  %v189 = vpack.c.b16 %v183, %v182
  %v190 = vpack.c.b16 %v185, %v184
  %v191 = vpack.c.b16 %v187, %v186
  %vm192 = vcmask 523264
  %v194 = vsel %vm192, %v188, 0
  %v197 = vsel %vm192, %v189, 0
  %v200 = vsel %vm192, %v190, 0
  %v203 = vsel %vm192, %v191, 0
  %205 = vmatprep.subr.bf16.mxu0 %v165
  %206 = vmatpush1.bf16.msra.mxu0 %v164
  %207 = vmatprep.subr.bf16.mxu0 %v167
  %208 = vmatpush1.bf16.msra.mxu0 %v166
  %209 = vmatprep.subr.bf16.mxu0 %v169
  %210 = vmatpush1.bf16.msra.mxu0 %v168
  %211 = vmatprep.subr.bf16.mxu0 %v171
  %212 = vmatpush1.bf16.msra.mxu0 %v170
  %213 = vmatprep.subr.bf16.mxu0 0
  %214 = vmatpush1.bf16.msra.mxu0 0
  %215 = vmatprep.subr.bf16.mxu0 0
  %216 = vmatpush1.bf16.msra.mxu0 0
  %217 = vmatprep.subr.bf16.mxu0 0
  %218 = vmatpush1.bf16.msra.mxu0 0
  %219 = vmatprep.subr.bf16.mxu0 0
  %220 = vmatpush1.bf16.msra.mxu0 0
  %221 = vmatprep.subr.bf16.mxu0 0
  %222 = vmatpush1.bf16.msra.mxu0 0
  %223 = vmatprep.subr.bf16.mxu0 0
  %224 = vmatpush1.bf16.msra.mxu0 0
  %225 = vmatprep.subr.bf16.mxu0 0
  %226 = vmatpush1.bf16.msra.mxu0 0
  %227 = vmatprep.subr.bf16.mxu0 0
  %228 = vmatpush1.bf16.msra.mxu0 0
  %229 = vmatprep.subr.bf16.mxu0 0
  %230 = vmatpush1.bf16.msra.mxu0 0
  %231 = vmatprep.subr.bf16.mxu0 0
  %232 = vmatpush1.bf16.msra.mxu0 0
  %233 = vmatprep.subr.bf16.mxu0 0
  %234 = vmatpush1.bf16.msra.mxu0 0
  %235 = vmatprep.subr.bf16.mxu0 0
  %236 = vmatpush1.bf16.msra.mxu0 0
  %237 = vmatprep.mubr.bf16.mxu0 0
  %238 = vmatmul.mubr.bf16.gmra.mrb[0].mxu0 %v194
  %v239 = vpop.f32.mrb[0].mxu0
  %v240 = vadd.f32 0.0, %v239
  %v241 = vpop.f32.mrb[0].mxu0
  %v242 = vadd.f32 0.0, %v241
  %v243 = vpop.f32.mrb[0].mxu0
  %v244 = vadd.f32 0.0, %v243
  %v245 = vpop.f32.mrb[0].mxu0
  %v246 = vadd.f32 0.0, %v245
  %247 = vmatprep.mubr.bf16.mxu0 0
  %248 = vmatmul.mubr.bf16.gmra.mrb[0].mxu0 %v197
  %v249 = vpop.f32.mrb[0].mxu0
  %v250 = vadd.f32 0.0, %v249
  %v251 = vpop.f32.mrb[0].mxu0
  %v252 = vadd.f32 0.0, %v251
  %v253 = vpop.f32.mrb[0].mxu0
  %v254 = vadd.f32 0.0, %v253
  %v255 = vpop.f32.mrb[0].mxu0
  %v256 = vadd.f32 0.0, %v255
  %257 = vmatprep.mubr.bf16.mxu0 0
  %258 = vmatmul.mubr.bf16.gmra.mrb[0].mxu0 %v200
  %v259 = vpop.f32.mrb[0].mxu0
  %v260 = vadd.f32 0.0, %v259
  %v261 = vpop.f32.mrb[0].mxu0
  %v262 = vadd.f32 0.0, %v261
  %v263 = vpop.f32.mrb[0].mxu0
  %v264 = vadd.f32 0.0, %v263
  %v265 = vpop.f32.mrb[0].mxu0
  %v266 = vadd.f32 0.0, %v265
  %267 = vmatprep.mubr.bf16.mxu0 0
  %268 = vmatmul.mubr.bf16.gmra.mrb[0].mxu0 %v203
  %v269 = vpop.f32.mrb[0].mxu0
  %v270 = vadd.f32 0.0, %v269
  %v271 = vpop.f32.mrb[0].mxu0
  %v272 = vadd.f32 0.0, %v271
  %v273 = vpop.f32.mrb[0].mxu0
  %v274 = vadd.f32 0.0, %v273
  %v275 = vpop.f32.mrb[0].mxu0
  %v276 = vadd.f32 0.0, %v275
  %277 = vdwg.mxu0
  %v278 = vmax.f32 %v240, 0.0
  %v279 = vmax.f32 %v242, 0.0
  %v280 = vmax.f32 %v244, 0.0
  %v281 = vmax.f32 %v246, 0.0
  %v282 = vmax.f32 %v250, 0.0
  %v283 = vmax.f32 %v252, 0.0
  %v284 = vmax.f32 %v254, 0.0
  %v285 = vmax.f32 %v256, 0.0
  %v286 = vmax.f32 %v260, 0.0
  %v287 = vmax.f32 %v262, 0.0
  %v288 = vmax.f32 %v264, 0.0
  %v289 = vmax.f32 %v266, 0.0
  %v290 = vmax.f32 %v270, 0.0
  %v291 = vmax.f32 %v272, 0.0
  %v292 = vmax.f32 %v274, 0.0
  %v293 = vmax.f32 %v276, 0.0
  %v294 = vpack.c.bf16 %v280, %v278
  %v295 = vpack.c.bf16 %v281, %v279
  %v296 = vpack.c.bf16 %v284, %v282
  %v297 = vpack.c.bf16 %v285, %v283
  %v298 = vpack.c.bf16 %v288, %v286
  %v299 = vpack.c.bf16 %v289, %v287
  %v300 = vpack.c.bf16 %v292, %v290
  %v301 = vpack.c.bf16 %v293, %v291
  %v302 = vld [vmem:[%s3] sm:$0xf]
  %v303 = vld [vmem:[%s3 + $0x4] sm:$0xf]
  %v304 = vld [vmem:[%s3 + $0x8] sm:$0xf]
  %v305 = vld [vmem:[%s3 + $0xc] sm:$0xf]
  %v306 = vld [vmem:[%s3 + $0x10] sm:$0xf]
  %v307 = vld [vmem:[%s3 + $0x14] sm:$0xf]
  %v308 = vld [vmem:[%s3 + $0x18] sm:$0xf]
  %v309 = vld [vmem:[%s3 + $0x1c] sm:$0xf]
  %v310 = vld [vmem:[%s3 + $0x20] sm:$0xf]
  %v311 = vld [vmem:[%s3 + $0x24] sm:$0xf]
  %v312 = vld [vmem:[%s3 + $0x28] sm:$0xf]
  %v313 = vld [vmem:[%s3 + $0x2c] sm:$0xf]
  %v314 = vld [vmem:[%s3 + $0x30] sm:$0xf]
  %v315 = vld [vmem:[%s3 + $0x34] sm:$0xf]
  %v316 = vld [vmem:[%s3 + $0x38] sm:$0xf]
  %v317 = vld [vmem:[%s3 + $0x3c] sm:$0xf]
  %v318 = vld [vmem:[%s3 + $0x40] sm:$0xf]
  %v319 = vld [vmem:[%s3 + $0x44] sm:$0xf]
  %v320 = vld [vmem:[%s3 + $0x48] sm:$0xf]
  %v321 = vld [vmem:[%s3 + $0x4c] sm:$0xf]
  %v322 = vld [vmem:[%s3 + $0x50] sm:$0xf]
  %v323 = vld [vmem:[%s3 + $0x54] sm:$0xf]
  %v324 = vld [vmem:[%s3 + $0x58] sm:$0xf]
  %v325 = vld [vmem:[%s3 + $0x5c] sm:$0xf]
  %v326 = vld [vmem:[%s3 + $0x60] sm:$0xf]
  %v327 = vld [vmem:[%s3 + $0x64] sm:$0xf]
  %v328 = vld [vmem:[%s3 + $0x68] sm:$0xf]
  %v329 = vld [vmem:[%s3 + $0x6c] sm:$0xf]
  %v330 = vld [vmem:[%s3 + $0x70] sm:$0xf]
  %v331 = vld [vmem:[%s3 + $0x74] sm:$0xf]
  %v332 = vld [vmem:[%s3 + $0x78] sm:$0xf]
  %v333 = vld [vmem:[%s3 + $0x7c] sm:$0xf]
  %v366 = vunpack.c.l.b16 %v302
  %v367 = vunpack.c.l.b16 %v303
  %v368 = vunpack.c.l.b16 %v304
  %v369 = vunpack.c.l.b16 %v305
  %v370 = vunpack.c.l.b16 %v306
  %v371 = vunpack.c.l.b16 %v307
  %v372 = vunpack.c.l.b16 %v308
  %v373 = vunpack.c.l.b16 %v309
  %v374 = vunpack.c.l.b16 %v310
  %v375 = vunpack.c.l.b16 %v311
  %v376 = vunpack.c.l.b16 %v312
  %v377 = vunpack.c.l.b16 %v313
  %v378 = vunpack.c.l.b16 %v314
  %v379 = vunpack.c.l.b16 %v315
  %v380 = vunpack.c.l.b16 %v316
  %v381 = vunpack.c.l.b16 %v317
  %v382 = vunpack.c.l.b16 %v318
  %v383 = vunpack.c.l.b16 %v319
  %v384 = vunpack.c.l.b16 %v320
  %v385 = vunpack.c.l.b16 %v321
  %v386 = vunpack.c.l.b16 %v322
  %v387 = vunpack.c.l.b16 %v323
  %v388 = vunpack.c.l.b16 %v324
  %v389 = vunpack.c.l.b16 %v325
  %v390 = vunpack.c.l.b16 %v326
  %v391 = vunpack.c.l.b16 %v327
  %v392 = vunpack.c.l.b16 %v328
  %v393 = vunpack.c.l.b16 %v329
  %v394 = vunpack.c.l.b16 %v330
  %v395 = vunpack.c.l.b16 %v331
  %v396 = vunpack.c.l.b16 %v332
  %v397 = vunpack.c.l.b16 %v333
  %v398 = vpack.c.b16 %v367, %v366
  %v399 = vpack.c.b16 %v369, %v368
  %v400 = vpack.c.b16 %v371, %v370
  %v401 = vpack.c.b16 %v373, %v372
  %v402 = vpack.c.b16 %v375, %v374
  %v403 = vpack.c.b16 %v377, %v376
  %v404 = vpack.c.b16 %v379, %v378
  %v405 = vpack.c.b16 %v381, %v380
  %v406 = vpack.c.b16 %v383, %v382
  %v407 = vpack.c.b16 %v385, %v384
  %v408 = vpack.c.b16 %v387, %v386
  %v409 = vpack.c.b16 %v389, %v388
  %v410 = vpack.c.b16 %v391, %v390
  %v411 = vpack.c.b16 %v393, %v392
  %v412 = vpack.c.b16 %v395, %v394
  %v413 = vpack.c.b16 %v397, %v396
  %430 = vmatprep.subr.bf16.mxu0 0
  %431 = vmatpush1.bf16.msra.mxu0 %v398
  %432 = vmatprep.subr.bf16.mxu0 0
  %433 = vmatpush1.bf16.msra.mxu0 %v399
  %434 = vmatprep.subr.bf16.mxu0 0
  %435 = vmatpush1.bf16.msra.mxu0 %v400
  %436 = vmatprep.subr.bf16.mxu0 0
  %437 = vmatpush1.bf16.msra.mxu0 %v401
  %438 = vmatprep.subr.bf16.mxu0 0
  %439 = vmatpush1.bf16.msra.mxu0 %v402
  %440 = vmatprep.subr.bf16.mxu0 0
  %441 = vmatpush1.bf16.msra.mxu0 %v403
  %442 = vmatprep.subr.bf16.mxu0 0
  %443 = vmatpush1.bf16.msra.mxu0 %v404
  %444 = vmatprep.subr.bf16.mxu0 0
  %445 = vmatpush1.bf16.msra.mxu0 %v405
  %446 = vmatprep.subr.bf16.mxu0 0
  %447 = vmatpush1.bf16.msra.mxu0 %v406
  %448 = vmatprep.subr.bf16.mxu0 0
  %449 = vmatpush1.bf16.msra.mxu0 %v407
  %450 = vmatprep.subr.bf16.mxu0 0
  %451 = vmatpush1.bf16.msra.mxu0 %v408
  %452 = vmatprep.subr.bf16.mxu0 0
  %453 = vmatpush1.bf16.msra.mxu0 %v409
  %454 = vmatprep.subr.bf16.mxu0 0
  %455 = vmatpush1.bf16.msra.mxu0 %v410
  %456 = vmatprep.subr.bf16.mxu0 0
  %457 = vmatpush1.bf16.msra.mxu0 %v411
  %458 = vmatprep.subr.bf16.mxu0 0
  %459 = vmatpush1.bf16.msra.mxu0 %v412
  %460 = vmatprep.subr.bf16.mxu0 0
  %461 = vmatpush1.bf16.msra.mxu0 %v413
  %462 = vmatprep.mubr.bf16.mxu0 %v295
  %463 = vmatmul.mubr.bf16.gmra.mrb[0].mxu0 %v294
  %v464 = vpop.f32.mrb[0].mxu0
  %v465 = vadd.f32 0.0, %v464
  %v466 = vpop.f32.mrb[0].mxu0
  %v467 = vpop.f32.mrb[0].mxu0
  %v468 = vadd.f32 0.0, %v467
  %v469 = vpop.f32.mrb[0].mxu0
  %470 = vmatprep.mubr.bf16.mxu0 %v297
  %471 = vmatmul.mubr.bf16.gmra.mrb[0].mxu0 %v296
  %v472 = vpop.f32.mrb[0].mxu0
  %v473 = vadd.f32 0.0, %v472
  %v474 = vpop.f32.mrb[0].mxu0
  %v475 = vpop.f32.mrb[0].mxu0
  %v476 = vadd.f32 0.0, %v475
  %v477 = vpop.f32.mrb[0].mxu0
  %478 = vmatprep.mubr.bf16.mxu0 %v299
  %479 = vmatmul.mubr.bf16.gmra.mrb[0].mxu0 %v298
  %v480 = vpop.f32.mrb[0].mxu0
  %v481 = vadd.f32 0.0, %v480
  %v482 = vpop.f32.mrb[0].mxu0
  %v483 = vpop.f32.mrb[0].mxu0
  %v484 = vadd.f32 0.0, %v483
  %v485 = vpop.f32.mrb[0].mxu0
  %486 = vmatprep.mubr.bf16.mxu0 %v301
  %487 = vmatmul.mubr.bf16.gmra.mrb[0].mxu0 %v300
  %v488 = vpop.f32.mrb[0].mxu0
  %v489 = vadd.f32 0.0, %v488
  %v490 = vpop.f32.mrb[0].mxu0
  %v491 = vpop.f32.mrb[0].mxu0
  %v492 = vadd.f32 0.0, %v491
  %v493 = vpop.f32.mrb[0].mxu0
  %494 = vdwg.mxu0
  %v495 = vpack.c.bf16 %v468, %v465
  %v496 = vpack.c.bf16 %v476, %v473
  %v497 = vpack.c.bf16 %v484, %v481
  %v498 = vpack.c.bf16 %v492, %v489
  %499 = vmatprep.subr.bf16.mxu0 0
  %500 = vmatpush1.bf16.msra.mxu0 %v495
  %501 = vmatprep.subr.bf16.mxu0 0
  %502 = vmatpush1.bf16.msra.mxu0 %v496
  %503 = vmatprep.subr.bf16.mxu0 0
  %504 = vmatpush1.bf16.msra.mxu0 %v497
  %505 = vmatprep.subr.bf16.mxu0 0
  %506 = vmatpush1.bf16.msra.mxu0 %v498
  %507 = vmatprep.subr.bf16.mxu0 0
  %508 = vmatpush1.bf16.msra.mxu0 0
  %509 = vmatprep.subr.bf16.mxu0 0
  %510 = vmatpush1.bf16.msra.mxu0 0
  %511 = vmatprep.subr.bf16.mxu0 0
  %512 = vmatpush1.bf16.msra.mxu0 0
  %513 = vmatprep.subr.bf16.mxu0 0
  %514 = vmatpush1.bf16.msra.mxu0 0
  %515 = vmatprep.subr.bf16.mxu0 0
  %516 = vmatpush1.bf16.msra.mxu0 0
  %517 = vmatprep.subr.bf16.mxu0 0
  %518 = vmatpush1.bf16.msra.mxu0 0
  %519 = vmatprep.subr.bf16.mxu0 0
  %520 = vmatpush1.bf16.msra.mxu0 0
  %521 = vmatprep.subr.bf16.mxu0 0
  %522 = vmatpush1.bf16.msra.mxu0 0
  %523 = vmatprep.subr.bf16.mxu0 0
  %524 = vmatpush1.bf16.msra.mxu0 0
  %525 = vmatprep.subr.bf16.mxu0 0
  %526 = vmatpush1.bf16.msra.mxu0 0
  %527 = vmatprep.subr.bf16.mxu0 0
  %528 = vmatpush1.bf16.msra.mxu0 0
  %529 = vmatprep.subr.bf16.mxu0 0
  %530 = vmatpush1.bf16.msra.mxu0 0
  %531 = vmatprep.mubr.bf16.mxu0 0
  %532 = vmatmul.mubr.bf16.gmra.mrb[0].mxu0 %v194
  %v533 = vpop.f32.mrb[0].mxu0
  %v534 = vadd.f32 0.0, %v533
  %v535 = vpop.f32.mrb[0].mxu0
  %v536 = vpop.f32.mrb[0].mxu0
  %v537 = vadd.f32 0.0, %v536
  %v538 = vpop.f32.mrb[0].mxu0
  %539 = vmatprep.mubr.bf16.mxu0 0
  %540 = vmatmul.mubr.bf16.gmra.mrb[0].mxu0 %v197
  %v541 = vpop.f32.mrb[0].mxu0
  %v542 = vadd.f32 0.0, %v541
  %v543 = vpop.f32.mrb[0].mxu0
  %v544 = vpop.f32.mrb[0].mxu0
  %v545 = vadd.f32 0.0, %v544
  %v546 = vpop.f32.mrb[0].mxu0
  %547 = vmatprep.mubr.bf16.mxu0 0
  %548 = vmatmul.mubr.bf16.gmra.mrb[0].mxu0 %v200
  %v549 = vpop.f32.mrb[0].mxu0
  %v550 = vadd.f32 0.0, %v549
  %v551 = vpop.f32.mrb[0].mxu0
  %v552 = vpop.f32.mrb[0].mxu0
  %v553 = vadd.f32 0.0, %v552
  %v554 = vpop.f32.mrb[0].mxu0
  %555 = vmatprep.mubr.bf16.mxu0 0
  %556 = vmatmul.mubr.bf16.gmra.mrb[0].mxu0 %v203
  %v557 = vpop.f32.mrb[0].mxu0
  %v558 = vadd.f32 0.0, %v557
  %v559 = vpop.f32.mrb[0].mxu0
  %v560 = vpop.f32.mrb[0].mxu0
  %v561 = vadd.f32 0.0, %v560
  %v562 = vpop.f32.mrb[0].mxu0
  %563 = vdwg.mxu0
  %v564 = vmax.f32 %v534, 0.0
  %v565 = vmax.f32 %v537, 0.0
  %v566 = vmax.f32 %v542, 0.0
  %v567 = vmax.f32 %v545, 0.0
  %v568 = vmax.f32 %v550, 0.0
  %v569 = vmax.f32 %v553, 0.0
  %v570 = vmax.f32 %v558, 0.0
  %v571 = vmax.f32 %v561, 0.0
  %v572 = vadd.f32 %v564, %v565
  %v573 = vadd.f32 %v572, %v566
  %v574 = vadd.f32 %v573, %v567
  %v575 = vadd.f32 %v574, %v568
  %v576 = vadd.f32 %v575, %v569
  %v577 = vadd.f32 %v576, %v570
  %v578 = vadd.f32 %v577, %v571
  %v579 = vrot.slane %v578, 4
  %v580 = vadd.f32 %v578, %v579
  %v581 = vrot.slane %v580, 2
  %v582 = vadd.f32 %v580, %v581
  %v583 = vrot.slane %v582, 1
  %v584 = vadd.f32 %v582, %v583
  %v585 = vmul.f32 %v584, 0.015625
  %v586 = vsub.f32 %v564, %v585
  %v587 = vsub.f32 %v565, %v585
  %v588 = vsub.f32 %v566, %v585
  %v589 = vsub.f32 %v567, %v585
  %v590 = vsub.f32 %v568, %v585
  %v591 = vsub.f32 %v569, %v585
  %v592 = vsub.f32 %v570, %v585
  %v593 = vsub.f32 %v571, %v585
  %v594 = vpack.c.bf16 %v587, %v586
  %v595 = vpack.c.bf16 %v589, %v588
  %v596 = vpack.c.bf16 %v591, %v590
  %v597 = vpack.c.bf16 %v593, %v592
  %v602 = vunpack.c.l.b16 %v594
  %v603 = vunpack.c.h.b16 %v594
  %v604 = vunpack.c.l.b16 %v595
  %v605 = vunpack.c.h.b16 %v595
  %v606 = vunpack.c.l.b16 %v596
  %v607 = vunpack.c.h.b16 %v596
  %v608 = vunpack.c.l.b16 %v597
  %v609 = vunpack.c.h.b16 %v597
  %v610 = vpack.c.b16 %v602, %v602
  %v611 = vpack.c.b16 %v603, %v603
  %v612 = vpack.c.b16 %v604, %v604
  %v613 = vpack.c.b16 %v605, %v605
  %v614 = vpack.c.b16 %v606, %v606
  %v615 = vpack.c.b16 %v607, %v607
  %v616 = vpack.c.b16 %v608, %v608
  %v617 = vpack.c.b16 %v609, %v609
  %626 = vst [vmem:[%s4] sm:$0xf] %v610
  %627 = vst [vmem:[%s4 + $0x4] sm:$0xf] %v611
  %628 = vst [vmem:[%s4 + $0x8] sm:$0xf] %v612
  %629 = vst [vmem:[%s4 + $0xc] sm:$0xf] %v613
  %630 = vst [vmem:[%s4 + $0x10] sm:$0xf] %v614
  %631 = vst [vmem:[%s4 + $0x14] sm:$0xf] %v615
  %632 = vst [vmem:[%s4 + $0x18] sm:$0xf] %v616
  %633 = vst [vmem:[%s4 + $0x1c] sm:$0xf] %v617
  // Predicated region
  $region18: #{graph_diffusion_forward.2} parent=0 // pred_check
    _
  $region19: #{graph_diffusion_forward.2} parent=0 // pred_check_branch
    %635 = sbr.rel (0) target = $region21
  $region20: #{graph_diffusion_forward.2} parent=0 // pred_region
    _
  $region21: #{graph_diffusion_forward.2} parent=0 // pred_fallthru
    _
  // Predicated region
  $region22: #{graph_diffusion_forward.2} parent=0 // pred_check
    _
  $region23: #{graph_diffusion_forward.2} parent=0 // pred_check_branch
    %637 = sbr.rel (0) target = $region25
  $region24: #{graph_diffusion_forward.2} parent=0 // pred_region
    _
  $region25: #{graph_diffusion_forward.2} parent=0 // pred_fallthru
    _

// kernel: graph_diffusion_forward.3
$region0: #{graph_diffusion_forward.3}
  #allocation0 [shape = 'u32[]', space=smem, size = 0x4, offset = 0x4, fixed_abs, tag = 'smem constant byte address 0x4 - core index']
  #allocation1 [shape = 'u32[144,128]{1,0:T(1,128)}', space=vmem, size = 0x12000, scoped, tag = 'internal scratch']
  #allocation2 [shape = 's32[1]{0}', space=sflag, size = 0x4, scoped, tag = 'scoped memory for graph_diffusion_forward.3']
  #allocation3 [shape = 'u8[512]{0}', space=smem, size = 0x200, scoped, tag = 'prefetched SMEM operand 0']
  %s0 = inlined_call_operand.vmem [shape: f32[5], index: 0, kind: input, shape index: {}]
  %s1 = inlined_call_operand.vmem [shape: bf16[128,128], index: 1, kind: input, shape index: {}, may-alias: {1,2}]
  %s2 = inlined_call_operand.vmem [shape: bf16[128,128], index: 2, kind: input, shape index: {}, may-alias: {1,2}]
  %s3 = inlined_call_operand.vmem [shape: f32[128,128], index: 3, kind: output, shape index: {}]
  %s4 = sld [smem:[#allocation0]]
  $region18: #{graph_diffusion_forward.3} parent=0
    _
  %s6 = ssub.s32 1, %s4
  %s7 = scalar_select 0, %s6, %s4
  %s8 = sshll.u32 %s0, 4
  %s9 = int_to_ptr.vmem [resolvable:$true] %s8
  %11 = dma.vmem_to_smem %s9, 16, [#allocation3], [#allocation2]
  %12 = dma.done [#allocation2], 16
  %13 = sfence
  // Predicated region
  $region2: #{graph_diffusion_forward.3} parent=0 // pred_check
    _
  $region3: #{graph_diffusion_forward.3} parent=0 // pred_check_branch
    %15 = sbr.rel (0) target = $region5
  $region4: #{graph_diffusion_forward.3} parent=0 // pred_region
    _
  $region5: #{graph_diffusion_forward.3} parent=0 // pred_fallthru
    _
  // Predicated region
  $region6: #{graph_diffusion_forward.3} parent=0 // pred_check
    _
  $region7: #{graph_diffusion_forward.3} parent=0 // pred_check_branch
    %17 = sbr.rel (0) target = $region9
  $region8: #{graph_diffusion_forward.3} parent=0 // pred_region
    _
  $region9: #{graph_diffusion_forward.3} parent=0 // pred_fallthru
    _
  %v20 = vld [vmem:[%s1] sm:$0xf]
  %v21 = vld [vmem:[%s1 + $0x4] sm:$0xf]
  %v22 = vld [vmem:[%s1 + $0x8] sm:$0xf]
  %v23 = vld [vmem:[%s1 + $0xc] sm:$0xf]
  %v24 = vld [vmem:[%s1 + $0x10] sm:$0xf]
  %v25 = vld [vmem:[%s1 + $0x14] sm:$0xf]
  %v26 = vld [vmem:[%s1 + $0x18] sm:$0xf]
  %v27 = vld [vmem:[%s1 + $0x1c] sm:$0xf]
  %v28 = vld [vmem:[%s1 + $0x20] sm:$0xf]
  %v29 = vld [vmem:[%s1 + $0x24] sm:$0xf]
  %v30 = vld [vmem:[%s1 + $0x28] sm:$0xf]
  %v31 = vld [vmem:[%s1 + $0x2c] sm:$0xf]
  %v32 = vld [vmem:[%s1 + $0x30] sm:$0xf]
  %v33 = vld [vmem:[%s1 + $0x34] sm:$0xf]
  %v34 = vld [vmem:[%s1 + $0x38] sm:$0xf]
  %v35 = vld [vmem:[%s1 + $0x3c] sm:$0xf]
  %v36 = vmul.bf16 %v20, 1056980736
  %v37 = vmul.bf16 %v21, 1056980736
  %v38 = vmul.bf16 %v22, 1056980736
  %v39 = vmul.bf16 %v23, 1056980736
  %v40 = vmul.bf16 %v24, 1056980736
  %v41 = vmul.bf16 %v25, 1056980736
  %v42 = vmul.bf16 %v26, 1056980736
  %v43 = vmul.bf16 %v27, 1056980736
  %v44 = vmul.bf16 %v28, 1056980736
  %v45 = vmul.bf16 %v29, 1056980736
  %v46 = vmul.bf16 %v30, 1056980736
  %v47 = vmul.bf16 %v31, 1056980736
  %v48 = vmul.bf16 %v32, 1056980736
  %v49 = vmul.bf16 %v33, 1056980736
  %v50 = vmul.bf16 %v34, 1056980736
  %v51 = vmul.bf16 %v35, 1056980736
  %v52 = vld [vmem:[%s2] sm:$0xf]
  %v53 = vld [vmem:[%s2 + $0x4] sm:$0xf]
  %v54 = vld [vmem:[%s2 + $0x8] sm:$0xf]
  %v55 = vld [vmem:[%s2 + $0xc] sm:$0xf]
  %v56 = vld [vmem:[%s2 + $0x10] sm:$0xf]
  %v57 = vld [vmem:[%s2 + $0x14] sm:$0xf]
  %v58 = vld [vmem:[%s2 + $0x18] sm:$0xf]
  %v59 = vld [vmem:[%s2 + $0x1c] sm:$0xf]
  %v60 = vld [vmem:[%s2 + $0x20] sm:$0xf]
  %v61 = vld [vmem:[%s2 + $0x24] sm:$0xf]
  %v62 = vld [vmem:[%s2 + $0x28] sm:$0xf]
  %v63 = vld [vmem:[%s2 + $0x2c] sm:$0xf]
  %v64 = vld [vmem:[%s2 + $0x30] sm:$0xf]
  %v65 = vld [vmem:[%s2 + $0x34] sm:$0xf]
  %v66 = vld [vmem:[%s2 + $0x38] sm:$0xf]
  %v67 = vld [vmem:[%s2 + $0x3c] sm:$0xf]
  %v84 = vunpack.c.l.b16 %v36
  %v85 = vunpack.c.l.b16 %v37
  %v86 = vunpack.c.l.b16 %v38
  %v87 = vunpack.c.l.b16 %v39
  %v88 = vunpack.c.l.b16 %v40
  %v89 = vunpack.c.l.b16 %v41
  %v90 = vunpack.c.l.b16 %v42
  %v91 = vunpack.c.l.b16 %v43
  %v92 = vunpack.c.l.b16 %v44
  %v93 = vunpack.c.l.b16 %v45
  %v94 = vunpack.c.l.b16 %v46
  %v95 = vunpack.c.l.b16 %v47
  %v96 = vunpack.c.l.b16 %v48
  %v97 = vunpack.c.l.b16 %v49
  %v98 = vunpack.c.l.b16 %v50
  %v99 = vunpack.c.l.b16 %v51
  %v100 = vpack.c.b16 %v85, %v84
  %v101 = vpack.c.b16 %v87, %v86
  %v102 = vpack.c.b16 %v89, %v88
  %v103 = vpack.c.b16 %v91, %v90
  %v104 = vpack.c.b16 %v93, %v92
  %v105 = vpack.c.b16 %v95, %v94
  %v106 = vpack.c.b16 %v97, %v96
  %v107 = vpack.c.b16 %v99, %v98
  %v124 = vunpack.c.l.b16 %v52
  %v125 = vunpack.c.l.b16 %v53
  %v126 = vunpack.c.l.b16 %v54
  %v127 = vunpack.c.l.b16 %v55
  %v128 = vunpack.c.l.b16 %v56
  %v129 = vunpack.c.l.b16 %v57
  %v130 = vunpack.c.l.b16 %v58
  %v131 = vunpack.c.l.b16 %v59
  %v132 = vunpack.c.l.b16 %v60
  %v133 = vunpack.c.l.b16 %v61
  %v134 = vunpack.c.l.b16 %v62
  %v135 = vunpack.c.l.b16 %v63
  %v136 = vunpack.c.l.b16 %v64
  %v137 = vunpack.c.l.b16 %v65
  %v138 = vunpack.c.l.b16 %v66
  %v139 = vunpack.c.l.b16 %v67
  %v140 = vpack.c.b16 %v125, %v124
  %v141 = vpack.c.b16 %v127, %v126
  %v142 = vpack.c.b16 %v129, %v128
  %v143 = vpack.c.b16 %v131, %v130
  %v144 = vpack.c.b16 %v133, %v132
  %v145 = vpack.c.b16 %v135, %v134
  %v146 = vpack.c.b16 %v137, %v136
  %v147 = vpack.c.b16 %v139, %v138
  %vm148 = vcmask 261120
  %v150 = vsel %vm148, %v100, 0
  %v153 = vsel %vm148, %v101, 0
  %v156 = vsel %vm148, %v102, 0
  %v159 = vsel %vm148, %v103, 0
  %v162 = vsel %vm148, %v104, 0
  %v165 = vsel %vm148, %v105, 0
  %v168 = vsel %vm148, %v106, 0
  %v171 = vsel %vm148, %v107, 0
  %v174 = vsel %vm148, %v140, 0
  %v177 = vsel %vm148, %v141, 0
  %v180 = vsel %vm148, %v142, 0
  %v183 = vsel %vm148, %v143, 0
  %v186 = vsel %vm148, %v144, 0
  %v189 = vsel %vm148, %v145, 0
  %v192 = vsel %vm148, %v146, 0
  %v195 = vsel %vm148, %v147, 0
  %197 = vmatprep.subr.bf16.mxu0 0
  %198 = vmatpush1.bf16.xpose.msra.mxu0 %v174
  %199 = vmatprep.subr.bf16.mxu0 0
  %200 = vmatpush1.bf16.xpose.msra.mxu0 %v177
  %201 = vmatprep.subr.bf16.mxu0 0
  %202 = vmatpush1.bf16.xpose.msra.mxu0 %v180
  %203 = vmatprep.subr.bf16.mxu0 0
  %204 = vmatpush1.bf16.xpose.msra.mxu0 %v183
  %205 = vmatprep.subr.bf16.mxu0 0
  %206 = vmatpush1.bf16.xpose.msra.mxu0 %v186
  %207 = vmatprep.subr.bf16.mxu0 0
  %208 = vmatpush1.bf16.xpose.msra.mxu0 %v189
  %209 = vmatprep.subr.bf16.mxu0 0
  %210 = vmatpush1.bf16.xpose.msra.mxu0 %v192
  %211 = vmatprep.subr.bf16.mxu0 0
  %212 = vmatpush1.bf16.xpose.msra.mxu0 %v195
  %213 = vmatprep.subr.bf16.mxu0 0
  %214 = vmatpush1.bf16.xpose.msra.mxu0 0
  %215 = vmatprep.subr.bf16.mxu0 0
  %216 = vmatpush1.bf16.xpose.msra.mxu0 0
  %217 = vmatprep.subr.bf16.mxu0 0
  %218 = vmatpush1.bf16.xpose.msra.mxu0 0
  %219 = vmatprep.subr.bf16.mxu0 0
  %220 = vmatpush1.bf16.xpose.msra.mxu0 0
  %221 = vmatprep.subr.bf16.mxu0 0
  %222 = vmatpush1.bf16.xpose.msra.mxu0 0
  %223 = vmatprep.subr.bf16.mxu0 0
  %224 = vmatpush1.bf16.xpose.msra.mxu0 0
  %225 = vmatprep.subr.bf16.mxu0 0
  %226 = vmatpush1.bf16.xpose.msra.mxu0 0
  %227 = vmatprep.subr.bf16.mxu0 0
  %228 = vmatpush1.bf16.xpose.msra.mxu0 0
  %229 = vmatprep.mubr.bf16.mxu0 0
  %230 = vmatmul.mubr.bf16.gmra.mrb[0].mxu0 %v150
  %v231 = vpop.f32.mrb[0].mxu0
  %v232 = vadd.f32 0.0, %v231
  %v233 = vpop.f32.mrb[0].mxu0
  %v234 = vpop.f32.mrb[0].mxu0
  %v235 = vadd.f32 0.0, %v234
  %v236 = vpop.f32.mrb[0].mxu0
  %237 = vmatprep.mubr.bf16.mxu0 0
  %238 = vmatmul.mubr.bf16.gmra.mrb[0].mxu0 %v153
  %v239 = vpop.f32.mrb[0].mxu0
  %v240 = vadd.f32 0.0, %v239
  %v241 = vpop.f32.mrb[0].mxu0
  %v242 = vpop.f32.mrb[0].mxu0
  %v243 = vadd.f32 0.0, %v242
  %v244 = vpop.f32.mrb[0].mxu0
  %245 = vmatprep.mubr.bf16.mxu0 0
  %246 = vmatmul.mubr.bf16.gmra.mrb[0].mxu0 %v156
  %v247 = vpop.f32.mrb[0].mxu0
  %v248 = vadd.f32 0.0, %v247
  %v249 = vpop.f32.mrb[0].mxu0
  %v250 = vpop.f32.mrb[0].mxu0
  %v251 = vadd.f32 0.0, %v250
  %v252 = vpop.f32.mrb[0].mxu0
  %253 = vmatprep.mubr.bf16.mxu0 0
  %254 = vmatmul.mubr.bf16.gmra.mrb[0].mxu0 %v159
  %v255 = vpop.f32.mrb[0].mxu0
  %v256 = vadd.f32 0.0, %v255
  %v257 = vpop.f32.mrb[0].mxu0
  %v258 = vpop.f32.mrb[0].mxu0
  %v259 = vadd.f32 0.0, %v258
  %v260 = vpop.f32.mrb[0].mxu0
  %261 = vmatprep.mubr.bf16.mxu0 0
  %262 = vmatmul.mubr.bf16.gmra.mrb[0].mxu0 %v162
  %v263 = vpop.f32.mrb[0].mxu0
  %v264 = vadd.f32 0.0, %v263
  %v265 = vpop.f32.mrb[0].mxu0
  %v266 = vpop.f32.mrb[0].mxu0
  %v267 = vadd.f32 0.0, %v266
  %v268 = vpop.f32.mrb[0].mxu0
  %269 = vmatprep.mubr.bf16.mxu0 0
  %270 = vmatmul.mubr.bf16.gmra.mrb[0].mxu0 %v165
  %v271 = vpop.f32.mrb[0].mxu0
  %v272 = vadd.f32 0.0, %v271
  %v273 = vpop.f32.mrb[0].mxu0
  %v274 = vpop.f32.mrb[0].mxu0
  %v275 = vadd.f32 0.0, %v274
  %v276 = vpop.f32.mrb[0].mxu0
  %277 = vmatprep.mubr.bf16.mxu0 0
  %278 = vmatmul.mubr.bf16.gmra.mrb[0].mxu0 %v168
  %v279 = vpop.f32.mrb[0].mxu0
  %v280 = vadd.f32 0.0, %v279
  %v281 = vpop.f32.mrb[0].mxu0
  %v282 = vpop.f32.mrb[0].mxu0
  %v283 = vadd.f32 0.0, %v282
  %v284 = vpop.f32.mrb[0].mxu0
  %285 = vmatprep.mubr.bf16.mxu0 0
  %286 = vmatmul.mubr.bf16.gmra.mrb[0].mxu0 %v171
  %v287 = vpop.f32.mrb[0].mxu0
  %v288 = vadd.f32 0.0, %v287
  %v289 = vpop.f32.mrb[0].mxu0
  %v290 = vpop.f32.mrb[0].mxu0
  %v291 = vadd.f32 0.0, %v290
  %v292 = vpop.f32.mrb[0].mxu0
  %293 = vdwg.mxu0
  %s294 = sld [smem:[#allocation3]]
  %v295 = vtanh.pop %v232
  %v296 = vtanh.pop %v235
  %v297 = vtanh.pop %v240
  %v298 = vtanh.pop %v243
  %v299 = vtanh.pop %v248
  %v300 = vtanh.pop %v251
  %v301 = vtanh.pop %v256
  %v302 = vtanh.pop %v259
  %v303 = vtanh.pop %v264
  %v304 = vtanh.pop %v267
  %v305 = vtanh.pop %v272
  %v306 = vtanh.pop %v275
  %v307 = vtanh.pop %v280
  %v308 = vtanh.pop %v283
  %v309 = vtanh.pop %v288
  %v310 = vtanh.pop %v291
  %v311 = vstv %s294
  %v312 = vmul.f32 %v311, %v295
  %v313 = vmul.f32 %v311, %v296
  %v314 = vmul.f32 %v311, %v297
  %v315 = vmul.f32 %v311, %v298
  %v316 = vmul.f32 %v311, %v299
  %v317 = vmul.f32 %v311, %v300
  %v318 = vmul.f32 %v311, %v301
  %v319 = vmul.f32 %v311, %v302
  %v320 = vmul.f32 %v311, %v303
  %v321 = vmul.f32 %v311, %v304
  %v322 = vmul.f32 %v311, %v305
  %v323 = vmul.f32 %v311, %v306
  %v324 = vmul.f32 %v311, %v307
  %v325 = vmul.f32 %v311, %v308
  %v326 = vmul.f32 %v311, %v309
  %v327 = vmul.f32 %v311, %v310
  %328 = vrot.lane.b32.xlu0 %v100, 96
  %v329 = vpop.permute.xlu0 %328
  %330 = vrot.lane.b32.xlu0 %v101, 96
  %v331 = vpop.permute.xlu0 %330
  %332 = vrot.lane.b32.xlu0 %v102, 96
  %v333 = vpop.permute.xlu0 %332
  %334 = vrot.lane.b32.xlu0 %v103, 96
  %v335 = vpop.permute.xlu0 %334
  %336 = vrot.lane.b32.xlu0 %v104, 96
  %v337 = vpop.permute.xlu0 %336
  %338 = vrot.lane.b32.xlu0 %v105, 96
  %v339 = vpop.permute.xlu0 %338
  %340 = vrot.lane.b32.xlu0 %v106, 96
  %v341 = vpop.permute.xlu0 %340
  %342 = vrot.lane.b32.xlu0 %v107, 96
  %v343 = vpop.permute.xlu0 %342
  %344 = vrot.lane.b32.xlu0 %v140, 96
  %v345 = vpop.permute.xlu0 %344
  %346 = vrot.lane.b32.xlu0 %v141, 96
  %v347 = vpop.permute.xlu0 %346
  %348 = vrot.lane.b32.xlu0 %v142, 96
  %v349 = vpop.permute.xlu0 %348
  %350 = vrot.lane.b32.xlu0 %v143, 96
  %v351 = vpop.permute.xlu0 %350
  %352 = vrot.lane.b32.xlu0 %v144, 96
  %v353 = vpop.permute.xlu0 %352
  %354 = vrot.lane.b32.xlu0 %v145, 96
  %v355 = vpop.permute.xlu0 %354
  %356 = vrot.lane.b32.xlu0 %v146, 96
  %v357 = vpop.permute.xlu0 %356
  %358 = vrot.lane.b32.xlu0 %v147, 96
  %v359 = vpop.permute.xlu0 %358
  %v361 = vsel %vm148, %v329, 0
  %v364 = vsel %vm148, %v331, 0
  %v367 = vsel %vm148, %v333, 0
  %v370 = vsel %vm148, %v335, 0
  %v373 = vsel %vm148, %v337, 0
  %v376 = vsel %vm148, %v339, 0
  %v379 = vsel %vm148, %v341, 0
  %v382 = vsel %vm148, %v343, 0
  %v385 = vsel %vm148, %v345, 0
  %v388 = vsel %vm148, %v347, 0
  %v391 = vsel %vm148, %v349, 0
  %v394 = vsel %vm148, %v351, 0
  %v397 = vsel %vm148, %v353, 0
  %v400 = vsel %vm148, %v355, 0
  %v403 = vsel %vm148, %v357, 0
  %v406 = vsel %vm148, %v359, 0
  %408 = vmatprep.subr.bf16.mxu0 0
  %409 = vmatpush1.bf16.xpose.msra.mxu0 %v385
  %410 = vmatprep.subr.bf16.mxu0 0
  %411 = vmatpush1.bf16.xpose.msra.mxu0 %v388
  %412 = vmatprep.subr.bf16.mxu0 0
  %413 = vmatpush1.bf16.xpose.msra.mxu0 %v391
  %414 = vmatprep.subr.bf16.mxu0 0
  %415 = vmatpush1.bf16.xpose.msra.mxu0 %v394
  %416 = vmatprep.subr.bf16.mxu0 0
  %417 = vmatpush1.bf16.xpose.msra.mxu0 %v397
  %418 = vmatprep.subr.bf16.mxu0 0
  %419 = vmatpush1.bf16.xpose.msra.mxu0 %v400
  %420 = vmatprep.subr.bf16.mxu0 0
  %421 = vmatpush1.bf16.xpose.msra.mxu0 %v403
  %422 = vmatprep.subr.bf16.mxu0 0
  %423 = vmatpush1.bf16.xpose.msra.mxu0 %v406
  %424 = vmatprep.subr.bf16.mxu0 0
  %425 = vmatpush1.bf16.xpose.msra.mxu0 0
  %426 = vmatprep.subr.bf16.mxu0 0
  %427 = vmatpush1.bf16.xpose.msra.mxu0 0
  %428 = vmatprep.subr.bf16.mxu0 0
  %429 = vmatpush1.bf16.xpose.msra.mxu0 0
  %430 = vmatprep.subr.bf16.mxu0 0
  %431 = vmatpush1.bf16.xpose.msra.mxu0 0
  %432 = vmatprep.subr.bf16.mxu0 0
  %433 = vmatpush1.bf16.xpose.msra.mxu0 0
  %434 = vmatprep.subr.bf16.mxu0 0
  %435 = vmatpush1.bf16.xpose.msra.mxu0 0
  %436 = vmatprep.subr.bf16.mxu0 0
  %437 = vmatpush1.bf16.xpose.msra.mxu0 0
  %438 = vmatprep.subr.bf16.mxu0 0
  %439 = vmatpush1.bf16.xpose.msra.mxu0 0
  %440 = vmatprep.mubr.bf16.mxu0 0
  %441 = vmatmul.mubr.bf16.gmra.mrb[0].mxu0 %v361
  %v442 = vpop.f32.mrb[0].mxu0
  %v443 = vadd.f32 0.0, %v442
  %v444 = vpop.f32.mrb[0].mxu0
  %v445 = vpop.f32.mrb[0].mxu0
  %v446 = vadd.f32 0.0, %v445
  %v447 = vpop.f32.mrb[0].mxu0
  %448 = vmatprep.mubr.bf16.mxu0 0
  %449 = vmatmul.mubr.bf16.gmra.mrb[0].mxu0 %v364
  %v450 = vpop.f32.mrb[0].mxu0
  %v451 = vadd.f32 0.0, %v450
  %v452 = vpop.f32.mrb[0].mxu0
  %v453 = vpop.f32.mrb[0].mxu0
  %v454 = vadd.f32 0.0, %v453
  %v455 = vpop.f32.mrb[0].mxu0
  %456 = vmatprep.mubr.bf16.mxu0 0
  %457 = vmatmul.mubr.bf16.gmra.mrb[0].mxu0 %v367
  %v458 = vpop.f32.mrb[0].mxu0
  %v459 = vadd.f32 0.0, %v458
  %v460 = vpop.f32.mrb[0].mxu0
  %v461 = vpop.f32.mrb[0].mxu0
  %v462 = vadd.f32 0.0, %v461
  %v463 = vpop.f32.mrb[0].mxu0
  %464 = vmatprep.mubr.bf16.mxu0 0
  %465 = vmatmul.mubr.bf16.gmra.mrb[0].mxu0 %v370
  %v466 = vpop.f32.mrb[0].mxu0
  %v467 = vadd.f32 0.0, %v466
  %v468 = vpop.f32.mrb[0].mxu0
  %v469 = vpop.f32.mrb[0].mxu0
  %v470 = vadd.f32 0.0, %v469
  %v471 = vpop.f32.mrb[0].mxu0
  %472 = vmatprep.mubr.bf16.mxu0 0
  %473 = vmatmul.mubr.bf16.gmra.mrb[0].mxu0 %v373
  %v474 = vpop.f32.mrb[0].mxu0
  %v475 = vadd.f32 0.0, %v474
  %v476 = vpop.f32.mrb[0].mxu0
  %v477 = vpop.f32.mrb[0].mxu0
  %v478 = vadd.f32 0.0, %v477
  %v479 = vpop.f32.mrb[0].mxu0
  %480 = vmatprep.mubr.bf16.mxu0 0
  %481 = vmatmul.mubr.bf16.gmra.mrb[0].mxu0 %v376
  %v482 = vpop.f32.mrb[0].mxu0
  %v483 = vadd.f32 0.0, %v482
  %v484 = vpop.f32.mrb[0].mxu0
  %v485 = vpop.f32.mrb[0].mxu0
  %v486 = vadd.f32 0.0, %v485
  %v487 = vpop.f32.mrb[0].mxu0
  %488 = vmatprep.mubr.bf16.mxu0 0
  %489 = vmatmul.mubr.bf16.gmra.mrb[0].mxu0 %v379
  %v490 = vpop.f32.mrb[0].mxu0
  %v491 = vadd.f32 0.0, %v490
  %v492 = vpop.f32.mrb[0].mxu0
  %v493 = vpop.f32.mrb[0].mxu0
  %v494 = vadd.f32 0.0, %v493
  %v495 = vpop.f32.mrb[0].mxu0
  %496 = vmatprep.mubr.bf16.mxu0 0
  %497 = vmatmul.mubr.bf16.gmra.mrb[0].mxu0 %v382
  %v498 = vpop.f32.mrb[0].mxu0
  %v499 = vadd.f32 0.0, %v498
  %v500 = vpop.f32.mrb[0].mxu0
  %v501 = vpop.f32.mrb[0].mxu0
  %v502 = vadd.f32 0.0, %v501
  %v503 = vpop.f32.mrb[0].mxu0
  %504 = vdwg.mxu0
  %s505 = sld [smem:[#allocation3 + $0x1]]
  %v506 = vtanh.pop %v443
  %v507 = vtanh.pop %v446
  %v508 = vtanh.pop %v451
  %v509 = vtanh.pop %v454
  %v510 = vtanh.pop %v459
  %v511 = vtanh.pop %v462
  %v512 = vtanh.pop %v467
  %v513 = vtanh.pop %v470
  %v514 = vtanh.pop %v475
  %v515 = vtanh.pop %v478
  %v516 = vtanh.pop %v483
  %v517 = vtanh.pop %v486
  %v518 = vtanh.pop %v491
  %v519 = vtanh.pop %v494
  %v520 = vtanh.pop %v499
  %v521 = vtanh.pop %v502
  %v522 = vstv %s505
  %v523 = vmul.f32 %v522, %v506
  %v524 = vmul.f32 %v522, %v507
  %v525 = vmul.f32 %v522, %v508
  %v526 = vmul.f32 %v522, %v509
  %v527 = vmul.f32 %v522, %v510
  %v528 = vmul.f32 %v522, %v511
  %v529 = vmul.f32 %v522, %v512
  %v530 = vmul.f32 %v522, %v513
  %v531 = vmul.f32 %v522, %v514
  %v532 = vmul.f32 %v522, %v515
  %v533 = vmul.f32 %v522, %v516
  %v534 = vmul.f32 %v522, %v517
  %v535 = vmul.f32 %v522, %v518
  %v536 = vmul.f32 %v522, %v519
  %v537 = vmul.f32 %v522, %v520
  %v538 = vmul.f32 %v522, %v521
  %v539 = vadd.f32 %v312, %v523
  %v540 = vadd.f32 %v313, %v524
  %v541 = vadd.f32 %v314, %v525
  %v542 = vadd.f32 %v315, %v526
  %v543 = vadd.f32 %v316, %v527
  %v544 = vadd.f32 %v317, %v528
  %v545 = vadd.f32 %v318, %v529
  %v546 = vadd.f32 %v319, %v530
  %v547 = vadd.f32 %v320, %v531
  %v548 = vadd.f32 %v321, %v532
  %v549 = vadd.f32 %v322, %v533
  %v550 = vadd.f32 %v323, %v534
  %v551 = vadd.f32 %v324, %v535
  %v552 = vadd.f32 %v325, %v536
  %v553 = vadd.f32 %v326, %v537
  %v554 = vadd.f32 %v327, %v538
  %555 = vrot.lane.b32.xlu0 %v100, 64
  %v556 = vpop.permute.xlu0 %555
  %557 = vrot.lane.b32.xlu0 %v101, 64
  %v558 = vpop.permute.xlu0 %557
  %559 = vrot.lane.b32.xlu0 %v102, 64
  %v560 = vpop.permute.xlu0 %559
  %561 = vrot.lane.b32.xlu0 %v103, 64
  %v562 = vpop.permute.xlu0 %561
  %563 = vrot.lane.b32.xlu0 %v104, 64
  %v564 = vpop.permute.xlu0 %563
  %565 = vrot.lane.b32.xlu0 %v105, 64
  %v566 = vpop.permute.xlu0 %565
  %567 = vrot.lane.b32.xlu0 %v106, 64
  %v568 = vpop.permute.xlu0 %567
  %569 = vrot.lane.b32.xlu0 %v107, 64
  %v570 = vpop.permute.xlu0 %569
  %571 = vrot.lane.b32.xlu0 %v140, 64
  %v572 = vpop.permute.xlu0 %571
  %573 = vrot.lane.b32.xlu0 %v141, 64
  %v574 = vpop.permute.xlu0 %573
  %575 = vrot.lane.b32.xlu0 %v142, 64
  %v576 = vpop.permute.xlu0 %575
  %577 = vrot.lane.b32.xlu0 %v143, 64
  %v578 = vpop.permute.xlu0 %577
  %579 = vrot.lane.b32.xlu0 %v144, 64
  %v580 = vpop.permute.xlu0 %579
  %581 = vrot.lane.b32.xlu0 %v145, 64
  %v582 = vpop.permute.xlu0 %581
  %583 = vrot.lane.b32.xlu0 %v146, 64
  %v584 = vpop.permute.xlu0 %583
  %585 = vrot.lane.b32.xlu0 %v147, 64
  %v586 = vpop.permute.xlu0 %585
  %v588 = vsel %vm148, %v556, 0
  %v591 = vsel %vm148, %v558, 0
  %v594 = vsel %vm148, %v560, 0
  %v597 = vsel %vm148, %v562, 0
  %v600 = vsel %vm148, %v564, 0
  %v603 = vsel %vm148, %v566, 0
  %v606 = vsel %vm148, %v568, 0
  %v609 = vsel %vm148, %v570, 0
  %v612 = vsel %vm148, %v572, 0
  %v615 = vsel %vm148, %v574, 0
  %v618 = vsel %vm148, %v576, 0
  %v621 = vsel %vm148, %v578, 0
  %v624 = vsel %vm148, %v580, 0
  %v627 = vsel %vm148, %v582, 0
  %v630 = vsel %vm148, %v584, 0
  %v633 = vsel %vm148, %v586, 0
  %635 = vmatprep.subr.bf16.mxu0 0
  %636 = vmatpush1.bf16.xpose.msra.mxu0 %v612
  %637 = vmatprep.subr.bf16.mxu0 0
  %638 = vmatpush1.bf16.xpose.msra.mxu0 %v615
  %639 = vmatprep.subr.bf16.mxu0 0
  %640 = vmatpush1.bf16.xpose.msra.mxu0 %v618
  %641 = vmatprep.subr.bf16.mxu0 0
  %642 = vmatpush1.bf16.xpose.msra.mxu0 %v621
  %643 = vmatprep.subr.bf16.mxu0 0
  %644 = vmatpush1.bf16.xpose.msra.mxu0 %v624
  %645 = vmatprep.subr.bf16.mxu0 0
  %646 = vmatpush1.bf16.xpose.msra.mxu0 %v627
  %647 = vmatprep.subr.bf16.mxu0 0
  %648 = vmatpush1.bf16.xpose.msra.mxu0 %v630
  %649 = vmatprep.subr.bf16.mxu0 0
  %650 = vmatpush1.bf16.xpose.msra.mxu0 %v633
  %651 = vmatprep.subr.bf16.mxu0 0
  %652 = vmatpush1.bf16.xpose.msra.mxu0 0
  %653 = vmatprep.subr.bf16.mxu0 0
  %654 = vmatpush1.bf16.xpose.msra.mxu0 0
  %655 = vmatprep.subr.bf16.mxu0 0
  %656 = vmatpush1.bf16.xpose.msra.mxu0 0
  %657 = vmatprep.subr.bf16.mxu0 0
  %658 = vmatpush1.bf16.xpose.msra.mxu0 0
  %659 = vmatprep.subr.bf16.mxu0 0
  %660 = vmatpush1.bf16.xpose.msra.mxu0 0
  %661 = vmatprep.subr.bf16.mxu0 0
  %662 = vmatpush1.bf16.xpose.msra.mxu0 0
  %663 = vmatprep.subr.bf16.mxu0 0
  %664 = vmatpush1.bf16.xpose.msra.mxu0 0
  %665 = vmatprep.subr.bf16.mxu0 0
  %666 = vmatpush1.bf16.xpose.msra.mxu0 0
  %667 = vmatprep.mubr.bf16.mxu0 0
  %668 = vmatmul.mubr.bf16.gmra.mrb[0].mxu0 %v588
  %v669 = vpop.f32.mrb[0].mxu0
  %v670 = vadd.f32 0.0, %v669
  %v671 = vpop.f32.mrb[0].mxu0
  %v672 = vpop.f32.mrb[0].mxu0
  %v673 = vadd.f32 0.0, %v672
  %v674 = vpop.f32.mrb[0].mxu0
  %675 = vmatprep.mubr.bf16.mxu0 0
  %676 = vmatmul.mubr.bf16.gmra.mrb[0].mxu0 %v591
  %v677 = vpop.f32.mrb[0].mxu0
  %v678 = vadd.f32 0.0, %v677
  %v679 = vpop.f32.mrb[0].mxu0
  %v680 = vpop.f32.mrb[0].mxu0
  %v681 = vadd.f32 0.0, %v680
  %v682 = vpop.f32.mrb[0].mxu0
  %683 = vmatprep.mubr.bf16.mxu0 0
  %684 = vmatmul.mubr.bf16.gmra.mrb[0].mxu0 %v594
  %v685 = vpop.f32.mrb[0].mxu0
  %v686 = vadd.f32 0.0, %v685
  %v687 = vpop.f32.mrb[0].mxu0
  %v688 = vpop.f32.mrb[0].mxu0
  %v689 = vadd.f32 0.0, %v688
  %v690 = vpop.f32.mrb[0].mxu0
  %691 = vmatprep.mubr.bf16.mxu0 0
  %692 = vmatmul.mubr.bf16.gmra.mrb[0].mxu0 %v597
  %v693 = vpop.f32.mrb[0].mxu0
  %v694 = vadd.f32 0.0, %v693
  %v695 = vpop.f32.mrb[0].mxu0
  %v696 = vpop.f32.mrb[0].mxu0
  %v697 = vadd.f32 0.0, %v696
  %v698 = vpop.f32.mrb[0].mxu0
  %699 = vmatprep.mubr.bf16.mxu0 0
  %700 = vmatmul.mubr.bf16.gmra.mrb[0].mxu0 %v600
  %v701 = vpop.f32.mrb[0].mxu0
  %v702 = vadd.f32 0.0, %v701
  %v703 = vpop.f32.mrb[0].mxu0
  %v704 = vpop.f32.mrb[0].mxu0
  %v705 = vadd.f32 0.0, %v704
  %v706 = vpop.f32.mrb[0].mxu0
  %707 = vmatprep.mubr.bf16.mxu0 0
  %708 = vmatmul.mubr.bf16.gmra.mrb[0].mxu0 %v603
  %v709 = vpop.f32.mrb[0].mxu0
  %v710 = vadd.f32 0.0, %v709
  %v711 = vpop.f32.mrb[0].mxu0
  %v712 = vpop.f32.mrb[0].mxu0
  %v713 = vadd.f32 0.0, %v712
  %v714 = vpop.f32.mrb[0].mxu0
  %715 = vmatprep.mubr.bf16.mxu0 0
  %716 = vmatmul.mubr.bf16.gmra.mrb[0].mxu0 %v606
  %v717 = vpop.f32.mrb[0].mxu0
  %v718 = vadd.f32 0.0, %v717
  %v719 = vpop.f32.mrb[0].mxu0
  %v720 = vpop.f32.mrb[0].mxu0
  %v721 = vadd.f32 0.0, %v720
  %v722 = vpop.f32.mrb[0].mxu0
  %723 = vmatprep.mubr.bf16.mxu0 0
  %724 = vmatmul.mubr.bf16.gmra.mrb[0].mxu0 %v609
  %v725 = vpop.f32.mrb[0].mxu0
  %v726 = vadd.f32 0.0, %v725
  %v727 = vpop.f32.mrb[0].mxu0
  %v728 = vpop.f32.mrb[0].mxu0
  %v729 = vadd.f32 0.0, %v728
  %v730 = vpop.f32.mrb[0].mxu0
  %731 = vdwg.mxu0
  %s732 = sld [smem:[#allocation3 + $0x2]]
  %v733 = vtanh.pop %v670
  %v734 = vtanh.pop %v673
  %v735 = vtanh.pop %v678
  %v736 = vtanh.pop %v681
  %v737 = vtanh.pop %v686
  %v738 = vtanh.pop %v689
  %v739 = vtanh.pop %v694
  %v740 = vtanh.pop %v697
  %v741 = vtanh.pop %v702
  %v742 = vtanh.pop %v705
  %v743 = vtanh.pop %v710
  %v744 = vtanh.pop %v713
  %v745 = vtanh.pop %v718
  %v746 = vtanh.pop %v721
  %v747 = vtanh.pop %v726
  %v748 = vtanh.pop %v729
  %v749 = vstv %s732
  %v750 = vmul.f32 %v749, %v733
  %v751 = vmul.f32 %v749, %v734
  %v752 = vmul.f32 %v749, %v735
  %v753 = vmul.f32 %v749, %v736
  %v754 = vmul.f32 %v749, %v737
  %v755 = vmul.f32 %v749, %v738
  %v756 = vmul.f32 %v749, %v739
  %v757 = vmul.f32 %v749, %v740
  %v758 = vmul.f32 %v749, %v741
  %v759 = vmul.f32 %v749, %v742
  %v760 = vmul.f32 %v749, %v743
  %v761 = vmul.f32 %v749, %v744
  %v762 = vmul.f32 %v749, %v745
  %v763 = vmul.f32 %v749, %v746
  %v764 = vmul.f32 %v749, %v747
  %v765 = vmul.f32 %v749, %v748
  %v766 = vadd.f32 %v539, %v750
  %v767 = vadd.f32 %v540, %v751
  %v768 = vadd.f32 %v541, %v752
  %v769 = vadd.f32 %v542, %v753
  %v770 = vadd.f32 %v543, %v754
  %v771 = vadd.f32 %v544, %v755
  %v772 = vadd.f32 %v545, %v756
  %v773 = vadd.f32 %v546, %v757
  %v774 = vadd.f32 %v547, %v758
  %v775 = vadd.f32 %v548, %v759
  %v776 = vadd.f32 %v549, %v760
  %v777 = vadd.f32 %v550, %v761
  %v778 = vadd.f32 %v551, %v762
  %v779 = vadd.f32 %v552, %v763
  %v780 = vadd.f32 %v553, %v764
  %v781 = vadd.f32 %v554, %v765
  %782 = vrot.lane.b32.xlu0 %v100, 32
  %v783 = vpop.permute.xlu0 %782
  %784 = vrot.lane.b32.xlu0 %v101, 32
  %v785 = vpop.permute.xlu0 %784
  %786 = vrot.lane.b32.xlu0 %v102, 32
  %v787 = vpop.permute.xlu0 %786
  %788 = vrot.lane.b32.xlu0 %v103, 32
  %v789 = vpop.permute.xlu0 %788
  %790 = vrot.lane.b32.xlu0 %v104, 32
  %v791 = vpop.permute.xlu0 %790
  %792 = vrot.lane.b32.xlu0 %v105, 32
  %v793 = vpop.permute.xlu0 %792
  %794 = vrot.lane.b32.xlu0 %v106, 32
  %v795 = vpop.permute.xlu0 %794
  %796 = vrot.lane.b32.xlu0 %v107, 32
  %v797 = vpop.permute.xlu0 %796
  %798 = vrot.lane.b32.xlu0 %v140, 32
  %v799 = vpop.permute.xlu0 %798
  %800 = vrot.lane.b32.xlu0 %v141, 32
  %v801 = vpop.permute.xlu0 %800
  %802 = vrot.lane.b32.xlu0 %v142, 32
  %v803 = vpop.permute.xlu0 %802
  %804 = vrot.lane.b32.xlu0 %v143, 32
  %v805 = vpop.permute.xlu0 %804
  %806 = vrot.lane.b32.xlu0 %v144, 32
  %v807 = vpop.permute.xlu0 %806
  %808 = vrot.lane.b32.xlu0 %v145, 32
  %v809 = vpop.permute.xlu0 %808
  %810 = vrot.lane.b32.xlu0 %v146, 32
  %v811 = vpop.permute.xlu0 %810
  %812 = vrot.lane.b32.xlu0 %v147, 32
  %v813 = vpop.permute.xlu0 %812
  %v815 = vsel %vm148, %v783, 0
  %v818 = vsel %vm148, %v785, 0
  %v821 = vsel %vm148, %v787, 0
  %v824 = vsel %vm148, %v789, 0
  %v827 = vsel %vm148, %v791, 0
  %v830 = vsel %vm148, %v793, 0
  %v833 = vsel %vm148, %v795, 0
  %v836 = vsel %vm148, %v797, 0
  %v839 = vsel %vm148, %v799, 0
  %v842 = vsel %vm148, %v801, 0
  %v845 = vsel %vm148, %v803, 0
  %v848 = vsel %vm148, %v805, 0
  %v851 = vsel %vm148, %v807, 0
  %v854 = vsel %vm148, %v809, 0
  %v857 = vsel %vm148, %v811, 0
  %v860 = vsel %vm148, %v813, 0
  %862 = vmatprep.subr.bf16.mxu0 0
  %863 = vmatpush1.bf16.xpose.msra.mxu0 %v839
  %864 = vmatprep.subr.bf16.mxu0 0
  %865 = vmatpush1.bf16.xpose.msra.mxu0 %v842
  %866 = vmatprep.subr.bf16.mxu0 0
  %867 = vmatpush1.bf16.xpose.msra.mxu0 %v845
  %868 = vmatprep.subr.bf16.mxu0 0
  %869 = vmatpush1.bf16.xpose.msra.mxu0 %v848
  %870 = vmatprep.subr.bf16.mxu0 0
  %871 = vmatpush1.bf16.xpose.msra.mxu0 %v851
  %872 = vmatprep.subr.bf16.mxu0 0
  %873 = vmatpush1.bf16.xpose.msra.mxu0 %v854
  %874 = vmatprep.subr.bf16.mxu0 0
  %875 = vmatpush1.bf16.xpose.msra.mxu0 %v857
  %876 = vmatprep.subr.bf16.mxu0 0
  %877 = vmatpush1.bf16.xpose.msra.mxu0 %v860
  %878 = vmatprep.subr.bf16.mxu0 0
  %879 = vmatpush1.bf16.xpose.msra.mxu0 0
  %880 = vmatprep.subr.bf16.mxu0 0
  %881 = vmatpush1.bf16.xpose.msra.mxu0 0
  %882 = vmatprep.subr.bf16.mxu0 0
  %883 = vmatpush1.bf16.xpose.msra.mxu0 0
  %884 = vmatprep.subr.bf16.mxu0 0
  %885 = vmatpush1.bf16.xpose.msra.mxu0 0
  %886 = vmatprep.subr.bf16.mxu0 0
  %887 = vmatpush1.bf16.xpose.msra.mxu0 0
  %888 = vmatprep.subr.bf16.mxu0 0
  %889 = vmatpush1.bf16.xpose.msra.mxu0 0
  %890 = vmatprep.subr.bf16.mxu0 0
  %891 = vmatpush1.bf16.xpose.msra.mxu0 0
  %892 = vmatprep.subr.bf16.mxu0 0
  %893 = vmatpush1.bf16.xpose.msra.mxu0 0
  %894 = vmatprep.mubr.bf16.mxu0 0
  %895 = vmatmul.mubr.bf16.gmra.mrb[0].mxu0 %v815
  %v896 = vpop.f32.mrb[0].mxu0
  %v897 = vadd.f32 0.0, %v896
  %v898 = vpop.f32.mrb[0].mxu0
  %v899 = vpop.f32.mrb[0].mxu0
  %v900 = vadd.f32 0.0, %v899
  %v901 = vpop.f32.mrb[0].mxu0
  %902 = vmatprep.mubr.bf16.mxu0 0
  %903 = vmatmul.mubr.bf16.gmra.mrb[0].mxu0 %v818
  %v904 = vpop.f32.mrb[0].mxu0
  %v905 = vadd.f32 0.0, %v904
  %v906 = vpop.f32.mrb[0].mxu0
  %v907 = vpop.f32.mrb[0].mxu0
  %v908 = vadd.f32 0.0, %v907
  %v909 = vpop.f32.mrb[0].mxu0
  %910 = vmatprep.mubr.bf16.mxu0 0
  %911 = vmatmul.mubr.bf16.gmra.mrb[0].mxu0 %v821
  %v912 = vpop.f32.mrb[0].mxu0
  %v913 = vadd.f32 0.0, %v912
  %v914 = vpop.f32.mrb[0].mxu0
  %v915 = vpop.f32.mrb[0].mxu0
  %v916 = vadd.f32 0.0, %v915
  %v917 = vpop.f32.mrb[0].mxu0
  %918 = vmatprep.mubr.bf16.mxu0 0
  %919 = vmatmul.mubr.bf16.gmra.mrb[0].mxu0 %v824
  %v920 = vpop.f32.mrb[0].mxu0
  %v921 = vadd.f32 0.0, %v920
  %v922 = vpop.f32.mrb[0].mxu0
  %v923 = vpop.f32.mrb[0].mxu0
  %v924 = vadd.f32 0.0, %v923
  %v925 = vpop.f32.mrb[0].mxu0
  %926 = vmatprep.mubr.bf16.mxu0 0
  %927 = vmatmul.mubr.bf16.gmra.mrb[0].mxu0 %v827
  %v928 = vpop.f32.mrb[0].mxu0
  %v929 = vadd.f32 0.0, %v928
  %v930 = vpop.f32.mrb[0].mxu0
  %v931 = vpop.f32.mrb[0].mxu0
  %v932 = vadd.f32 0.0, %v931
  %v933 = vpop.f32.mrb[0].mxu0
  %934 = vmatprep.mubr.bf16.mxu0 0
  %935 = vmatmul.mubr.bf16.gmra.mrb[0].mxu0 %v830
  %v936 = vpop.f32.mrb[0].mxu0
  %v937 = vadd.f32 0.0, %v936
  %v938 = vpop.f32.mrb[0].mxu0
  %v939 = vpop.f32.mrb[0].mxu0
  %v940 = vadd.f32 0.0, %v939
  %v941 = vpop.f32.mrb[0].mxu0
  %942 = vmatprep.mubr.bf16.mxu0 0
  %943 = vmatmul.mubr.bf16.gmra.mrb[0].mxu0 %v833
  %v944 = vpop.f32.mrb[0].mxu0
  %v945 = vadd.f32 0.0, %v944
  %v946 = vpop.f32.mrb[0].mxu0
  %v947 = vpop.f32.mrb[0].mxu0
  %v948 = vadd.f32 0.0, %v947
  %v949 = vpop.f32.mrb[0].mxu0
  %950 = vmatprep.mubr.bf16.mxu0 0
  %951 = vmatmul.mubr.bf16.gmra.mrb[0].mxu0 %v836
  %v952 = vpop.f32.mrb[0].mxu0
  %v953 = vadd.f32 0.0, %v952
  %v954 = vpop.f32.mrb[0].mxu0
  %v955 = vpop.f32.mrb[0].mxu0
  %v956 = vadd.f32 0.0, %v955
  %v957 = vpop.f32.mrb[0].mxu0
  %958 = vdwg.mxu0
  %s959 = sld [smem:[#allocation3 + $0x3]]
  %v960 = vtanh.pop %v897
  %v961 = vtanh.pop %v900
  %v962 = vtanh.pop %v905
  %v963 = vtanh.pop %v908
  %v964 = vtanh.pop %v913
  %v965 = vtanh.pop %v916
  %v966 = vtanh.pop %v921
  %v967 = vtanh.pop %v924
  %v968 = vtanh.pop %v929
  %v969 = vtanh.pop %v932
  %v970 = vtanh.pop %v937
  %v971 = vtanh.pop %v940
  %v972 = vtanh.pop %v945
  %v973 = vtanh.pop %v948
  %v974 = vtanh.pop %v953
  %v975 = vtanh.pop %v956
  %v976 = vstv %s959
  %v977 = vmul.f32 %v976, %v960
  %v978 = vmul.f32 %v976, %v961
  %v979 = vmul.f32 %v976, %v962
  %v980 = vmul.f32 %v976, %v963
  %v981 = vmul.f32 %v976, %v964
  %v982 = vmul.f32 %v976, %v965
  %v983 = vmul.f32 %v976, %v966
  %v984 = vmul.f32 %v976, %v967
  %v985 = vmul.f32 %v976, %v968
  %v986 = vmul.f32 %v976, %v969
  %v987 = vmul.f32 %v976, %v970
  %v988 = vmul.f32 %v976, %v971
  %v989 = vmul.f32 %v976, %v972
  %v990 = vmul.f32 %v976, %v973
  %v991 = vmul.f32 %v976, %v974
  %v992 = vmul.f32 %v976, %v975
  %v993 = vadd.f32 %v766, %v977
  %v994 = vadd.f32 %v767, %v978
  %v995 = vadd.f32 %v768, %v979
  %v996 = vadd.f32 %v769, %v980
  %v997 = vadd.f32 %v770, %v981
  %v998 = vadd.f32 %v771, %v982
  %v999 = vadd.f32 %v772, %v983
  %v1000 = vadd.f32 %v773, %v984
  %v1001 = vadd.f32 %v774, %v985
  %v1002 = vadd.f32 %v775, %v986
  %v1003 = vadd.f32 %v776, %v987
  %v1004 = vadd.f32 %v777, %v988
  %v1005 = vadd.f32 %v778, %v989
  %v1006 = vadd.f32 %v779, %v990
  %v1007 = vadd.f32 %v780, %v991
  %v1008 = vadd.f32 %v781, %v992
  %s1009 = sld [smem:[#allocation3 + $0x4]]
  %v1010 = vstv %s1009
  %v1011 = vadd.f32 %v993, %v1010
  %v1012 = vadd.f32 %v994, %v1010
  %v1013 = vadd.f32 %v995, %v1010
  %v1014 = vadd.f32 %v996, %v1010
  %v1015 = vadd.f32 %v997, %v1010
  %v1016 = vadd.f32 %v998, %v1010
  %v1017 = vadd.f32 %v999, %v1010
  %v1018 = vadd.f32 %v1000, %v1010
  %v1019 = vadd.f32 %v1001, %v1010
  %v1020 = vadd.f32 %v1002, %v1010
  %v1021 = vadd.f32 %v1003, %v1010
  %v1022 = vadd.f32 %v1004, %v1010
  %v1023 = vadd.f32 %v1005, %v1010
  %v1024 = vadd.f32 %v1006, %v1010
  %v1025 = vadd.f32 %v1007, %v1010
  %v1026 = vadd.f32 %v1008, %v1010
  %1027 = vst [vmem:[%s3] sm:$0xff] %v1011
  %1028 = vst [vmem:[%s3 + $0x8] sm:$0xff] %v1012
  %1029 = vst [vmem:[%s3 + $0x10] sm:$0xff] %v1013
  %1030 = vst [vmem:[%s3 + $0x18] sm:$0xff] %v1014
  %1031 = vst [vmem:[%s3 + $0x20] sm:$0xff] %v1015
  %1032 = vst [vmem:[%s3 + $0x28] sm:$0xff] %v1016
  %1033 = vst [vmem:[%s3 + $0x30] sm:$0xff] %v1017
  %1034 = vst [vmem:[%s3 + $0x38] sm:$0xff] %v1018
  %1035 = vst [vmem:[%s3 + $0x40] sm:$0xff] %v1019
  %1036 = vst [vmem:[%s3 + $0x48] sm:$0xff] %v1020
  %1037 = vst [vmem:[%s3 + $0x50] sm:$0xff] %v1021
  %1038 = vst [vmem:[%s3 + $0x58] sm:$0xff] %v1022
  %1039 = vst [vmem:[%s3 + $0x60] sm:$0xff] %v1023
  %1040 = vst [vmem:[%s3 + $0x68] sm:$0xff] %v1024
  %1041 = vst [vmem:[%s3 + $0x70] sm:$0xff] %v1025
  %1042 = vst [vmem:[%s3 + $0x78] sm:$0xff] %v1026
  // Predicated region
  $region10: #{graph_diffusion_forward.3} parent=0 // pred_check
    _
  $region11: #{graph_diffusion_forward.3} parent=0 // pred_check_branch
    %1044 = sbr.rel (0) target = $region13
  $region12: #{graph_diffusion_forward.3} parent=0 // pred_region
    _
  $region13: #{graph_diffusion_forward.3} parent=0 // pred_fallthru
    _
  // Predicated region
  $region14: #{graph_diffusion_forward.3} parent=0 // pred_check
    _
  $region15: #{graph_diffusion_forward.3} parent=0 // pred_check_branch
    %1046 = sbr.rel (0) target = $region17
  $region16: #{graph_diffusion_forward.3} parent=0 // pred_region
    _
  $region17: #{graph_diffusion_forward.3} parent=0 // pred_fallthru
    _

</llo_original>
